<compile_context>
chip_gen: v6e
topology: v6e:2x2x1
jax: 0.10.0
libtpu: 0.0.40
codegen_flags: <defaults>
</compile_context>

<pallas_src>
import math

import jax
import jax.numpy as jnp
from jax import lax
from jax.experimental import pallas as pl
from jax.experimental.pallas import tpu as pltpu

LATENT_DIM = 128
EMBED_DIM = 64          # must equal NUM_FILTERS for the residual adds to typecheck
NUM_FILTERS = 64
NUM_LAYERS = 4
N_BLOCKS = 2            # n_blocks (small for the example; default in the module is 32)
BN_EPS = 1e-5


def get_timestep_embedding(t, embedding_dim):
    t = t * 1000.0
    half = embedding_dim // 2
    freq = jnp.exp(jnp.arange(half, dtype=jnp.float32) * (-jnp.log(10000.0) / (half - 1)))
    emb = t[:, None].astype(jnp.float32) * freq[None, :]
    return jnp.concatenate([jnp.sin(emb), jnp.cos(emb)], axis=1)


# --------------------------- row-tiled h projection ---------------------------------
def _h_proj_kernel(x_ref, w_ref, b_ref, o_ref):
    # h = Linear(latent_dim -> embedding_dim)(x), per pixel over channels
    o_ref[...] = (jnp.dot(x_ref[...].astype(jnp.bfloat16), w_ref[...],
                          preferred_element_type=jnp.float32) + b_ref[...])


# --------------------------- row-tiled head + final skip ----------------------------
def _head_skip_kernel(hin_ref, x_ref, w_ref, b_ref, o_ref):
    # out = x + Conv2d(num_filters -> latent_dim, 1)(h)
    head = (jnp.dot(hin_ref[...].astype(jnp.bfloat16), w_ref[...],
                    preferred_element_type=jnp.float32) + b_ref[...])
    o_ref[...] = x_ref[...] + head


# ------------------------------ ResNet block kernel ---------------------------------
def _resnet_kernel(h_ref, cond_ref, cw_ref, g_ref, bt_ref, condw_ref, out_ref):
    blk = pl.program_id(0)

    @pl.when(blk == 0)
    def _():
        out_ref[...] = h_ref[...]        # seed the resident accumulator with h

    res = out_ref[...]                   # (N, NF) f32, carried across blocks
    n_rows, nf = res.shape
    bsz = cond_ref.shape[0]
    hw = n_rows // bsz
    inv_n = 1.0 / n_rows

    cw = cw_ref[0]                       # (L, NF, NF) bf16   (in, out) layout
    g = g_ref[0]                         # (L, NF) f32        BN gamma
    bt = bt_ref[0]                       # (L, NF) f32        BN beta

    x = res
    for l in range(NUM_LAYERS):
        # 1x1 conv == per-row matmul over channels (bf16 operands, f32 accumulate).
        # Conv bias omitted: it is exactly cancelled by the BN mean subtraction.
        y = jnp.dot(x.astype(jnp.bfloat16), cw[l],
                    preferred_element_type=jnp.float32)
        # Single-pass training-mode BatchNorm statistics over all N = B*H*W rows.
        mean = jnp.sum(y, axis=0, keepdims=True) * inv_n
        msq = jnp.sum(y * y, axis=0, keepdims=True) * inv_n
        var = jnp.maximum(msq - mean * mean, 0.0)
        y = (y - mean) * lax.rsqrt(var + BN_EPS)
        y = y * g[l:l + 1, :] + bt[l:l + 1, :]
        x = jnp.maximum(y, 0.0)          # ReLU
        # TODO(synk): nn.Dropout2d treated as identity (eval semantics).

    # Bias-free cond projection: (B, EMBED) @ (EMBED, NF) once per block, then
    # broadcast over the H*W rows of each batch element inside the kernel.
    cproj = jnp.dot(cond_ref[...], condw_ref[0],
                    preferred_element_type=jnp.float32)          # (B, NF) f32
    cproj_rows = jnp.concatenate(
        [jnp.broadcast_to(cproj[b:b + 1, :], (hw, nf)) for b in range(bsz)], axis=0)

    out_ref[...] = x + cproj_rows + res                           # cond inject + residual


# ------------------------------------ wrapper ----------------------------------------
def score_net_forward(params, x, t, conditioning):
    B, H, W, LD = x.shape
    assert LD == LATENT_DIM
    N = B * H * W
    assert N % 8 == 0

    # timestep embedding + conditioning -> cond MLP (tiny (B,128)->(B,64); plain JAX)
    te = get_timestep_embedding(t, EMBED_DIM)                     # (B, EMBED)
    cond_in = jnp.concatenate([te, conditioning.astype(jnp.float32)], axis=1)
    c = cond_in @ params["c_w1"] + params["c_b1"]
    c = c * jax.nn.sigmoid(c)                                      # SiLU
    c = c @ params["c_w2"] + params["c_b2"]
    c = c * jax.nn.sigmoid(c)                                      # SiLU
    cond = c @ params["c_w3"] + params["c_b3"]                     # (B, EMBED) f32
    cond_bf16 = cond.astype(jnp.bfloat16)

    x_flat = x.reshape(N, LD).astype(jnp.float32)

    row_tile = math.gcd(N, 2048)                                   # divides N, multiple of 8
    n_tiles = N // row_tile

    # --- h = Linear(latent -> embed)(x), row-tiled & megacore-parallel --------------
    h0 = pl.pallas_call(
        _h_proj_kernel,
        out_shape=jax.ShapeDtypeStruct((N, EMBED_DIM), jnp.float32),
        grid_spec=pltpu.PrefetchScalarGridSpec(
            num_scalar_prefetch=0,
            grid=(n_tiles,),
            in_specs=[
                pl.BlockSpec((row_tile, LATENT_DIM), lambda i: (i, 0)),
                pl.BlockSpec((LATENT_DIM, EMBED_DIM), lambda i: (0, 0)),
                pl.BlockSpec((1, EMBED_DIM), lambda i: (0, 0)),
            ],
            out_specs=pl.BlockSpec((row_tile, EMBED_DIM), lambda i: (i, 0)),
        ),
        compiler_params=pltpu.CompilerParams(dimension_semantics=("parallel",)),
    )(x_flat, params["h_w"], params["h_b"])

    # --- ResNet blocks (serial grid, output block resident as accumulator) ----------
    vmem_est = (8 * N * NUM_FILTERS * 4                              # resident + temps
                + 2 * (NUM_LAYERS * NUM_FILTERS * NUM_FILTERS * 2    # conv_w (bf16, 2-buf)
                       + 2 * NUM_LAYERS * NUM_FILTERS * 4            # bn gamma/beta
                       + EMBED_DIM * NUM_FILTERS * 2)                # cond_w (bf16)
                + (2 << 20))
    vmem_limit = int(min(max(vmem_est, 16 << 20), 64 << 20))

    resnet_out = pl.pallas_call(
        _resnet_kernel,
        out_shape=jax.ShapeDtypeStruct((N, NUM_FILTERS), jnp.float32),
        grid_spec=pltpu.PrefetchScalarGridSpec(
            num_scalar_prefetch=0,
            grid=(N_BLOCKS,),
            in_specs=[
                pl.BlockSpec((N, NUM_FILTERS), lambda i: (0, 0)),                   # h (resident)
                pl.BlockSpec((B, EMBED_DIM), lambda i: (0, 0)),                     # cond (B, E)
                pl.BlockSpec((1, NUM_LAYERS, NUM_FILTERS, NUM_FILTERS),
                             lambda i: (i, 0, 0, 0)),                               # conv_w bf16
                pl.BlockSpec((1, NUM_LAYERS, NUM_FILTERS), lambda i: (i, 0, 0)),    # bn gamma
                pl.BlockSpec((1, NUM_LAYERS, NUM_FILTERS), lambda i: (i, 0, 0)),    # bn beta
                pl.BlockSpec((1, EMBED_DIM, NUM_FILTERS), lambda i: (i, 0, 0)),     # cond_w bf16
            ],
            out_specs=pl.BlockSpec((N, NUM_FILTERS), lambda i: (0, 0)),
        ),
        compiler_params=pltpu.CompilerParams(
            dimension_semantics=("arbitrary",),
            vmem_limit_bytes=vmem_limit),
    )(h0, cond_bf16, params["conv_w"], params["bn_g"], params["bn_b"], params["cond_w"])

    # --- head conv + ScoreNet final skip, row-tiled & megacore-parallel -------------
    out_flat = pl.pallas_call(
        _head_skip_kernel,
        out_shape=jax.ShapeDtypeStruct((N, LATENT_DIM), jnp.float32),
        grid_spec=pltpu.PrefetchScalarGridSpec(
            num_scalar_prefetch=0,
            grid=(n_tiles,),
            in_specs=[
                pl.BlockSpec((row_tile, NUM_FILTERS), lambda i: (i, 0)),
                pl.BlockSpec((row_tile, LATENT_DIM), lambda i: (i, 0)),
                pl.BlockSpec((NUM_FILTERS, LATENT_DIM), lambda i: (0, 0)),
                pl.BlockSpec((1, LATENT_DIM), lambda i: (0, 0)),
            ],
            out_specs=pl.BlockSpec((row_tile, LATENT_DIM), lambda i: (i, 0)),
        ),
        compiler_params=pltpu.CompilerParams(dimension_semantics=("parallel",)),
    )(resnet_out, x_flat, params["head_w"], params["head_b"])

    return out_flat.reshape(B, H, W, LD)


# ------------------------------ deterministic params --------------------------------
def init_params(key):
    ks = jax.random.split(key, 8)

    def lin_t(k, in_d, out_d, dtype=jnp.float32):
        # PyTorch nn.Linear-style init, stored pre-transposed (in, out) so kernels do x @ w
        s = 1.0 / jnp.sqrt(jnp.float32(in_d))
        return jax.random.uniform(k, (in_d, out_d), jnp.float32, -s, s).astype(dtype)

    p = {}
    # cond MLP (plain JAX): Linear(latent, 4E) -> SiLU -> Linear(4E, 4E) -> SiLU -> Linear(4E, E)
    p["c_w1"] = lin_t(ks[0], LATENT_DIM, 4 * EMBED_DIM)
    p["c_b1"] = jnp.zeros((1, 4 * EMBED_DIM), jnp.float32)
    p["c_w2"] = lin_t(ks[1], 4 * EMBED_DIM, 4 * EMBED_DIM)
    p["c_b2"] = jnp.zeros((1, 4 * EMBED_DIM), jnp.float32)
    p["c_w3"] = lin_t(ks[2], 4 * EMBED_DIM, EMBED_DIM)
    p["c_b3"] = jnp.zeros((1, EMBED_DIM), jnp.float32)
    # h = Linear(latent, emb)(x)   (bf16 matmul operand, f32 bias)
    p["h_w"] = lin_t(ks[3], LATENT_DIM, EMBED_DIM, jnp.bfloat16)
    p["h_b"] = jnp.zeros((1, EMBED_DIM), jnp.float32)
    # ResNet 1x1 convs, stored (block, layer, in, out) in bf16.
    # Conv bias omitted: mathematically cancelled by the BN mean subtraction.
    s = 1.0 / jnp.sqrt(jnp.float32(NUM_FILTERS))
    p["conv_w"] = jax.random.uniform(
        ks[4], (N_BLOCKS, NUM_LAYERS, NUM_FILTERS, NUM_FILTERS),
        jnp.float32, -s, s).astype(jnp.bfloat16)
    p["bn_g"] = jnp.ones((N_BLOCKS, NUM_LAYERS, NUM_FILTERS), jnp.float32)
    p["bn_b"] = jnp.zeros((N_BLOCKS, NUM_LAYERS, NUM_FILTERS), jnp.float32)
    # per-block bias-free cond projection Linear(emb -> num_filters), stored (emb, nf) bf16
    se = 1.0 / jnp.sqrt(jnp.float32(EMBED_DIM))
    p["cond_w"] = jax.random.uniform(
        ks[5], (N_BLOCKS, EMBED_DIM, NUM_FILTERS), jnp.float32, -se, se).astype(jnp.bfloat16)
    # head: Conv2d(num_filters -> latent_dim, 1), stored (nf, latent) bf16 + f32 bias
    p["head_w"] = lin_t(ks[6], NUM_FILTERS, LATENT_DIM, jnp.bfloat16)
    p["head_b"] = jnp.zeros((1, LATENT_DIM), jnp.float32)
    return p


if __name__ == "__main__":
    key = jax.random.PRNGKey(0)
    kp, kx, kt, kc = jax.random.split(key, 4)
    params = init_params(kp)

    B, H, W = 2, 8, 8
    x = jax.random.normal(kx, (B, H, W, LATENT_DIM), jnp.float32)
    t = jax.random.uniform(kt, (B,), jnp.float32)
    conditioning = jax.random.normal(kc, (B, LATENT_DIM - EMBED_DIM), jnp.float32)

    out = jax.jit(score_net_forward)(params, x, t, conditioning)
    out = jax.block_until_ready(out)
    assert out.shape == (B, H, W, LATENT_DIM)
    assert bool(jnp.all(jnp.isfinite(out)))
    print("KERNEL_OK")
</pallas_src>

<mosaic_0001>
module attributes {stable_mosaic.version = 11 : i64} {
  func.func @_h_proj_kernel(%arg0: i32, %arg1: memref<128x128xf32, #tpu.memory_space<vmem>>, %arg2: memref<128x64xbf16, #tpu.memory_space<vmem>>, %arg3: memref<1x64xf32, #tpu.memory_space<vmem>>, %arg4: memref<128x64xf32, #tpu.memory_space<vmem>>) attributes {dimension_semantics = [#tpu.dimension_semantics<parallel>], iteration_bounds = array<i64: 1>, scalar_prefetch = 0 : i64, scratch_operands = 0 : i64, tpu.core_type = #tpu.core_type<tc>, window_params = [{transform_indices = @transform_0, window_bounds = array<i64: 128, 128>}, {pipeline_mode = #tpu.pipeline_mode<synchronous>, transform_indices = @transform_1, window_bounds = array<i64: 128, 64>}, {pipeline_mode = #tpu.pipeline_mode<synchronous>, transform_indices = @transform_2, window_bounds = array<i64: 1, 64>}, {transform_indices = @transform_3, window_bounds = array<i64: 128, 64>}]} {
    %c0 = arith.constant 0 : index
    %c0_0 = arith.constant 0 : index
    %0 = vector.load %arg1[%c0, %c0_0] : memref<128x128xf32, #tpu.memory_space<vmem>>, vector<128x128xf32>
    %1 = arith.truncf %0 : vector<128x128xf32> to vector<128x128xbf16>
    %c0_1 = arith.constant 0 : index
    %c0_2 = arith.constant 0 : index
    %2 = vector.load %arg2[%c0_1, %c0_2] : memref<128x64xbf16, #tpu.memory_space<vmem>>, vector<128x64xbf16>
    %cst = arith.constant dense<0.000000e+00> : vector<128x64xf32>
    %3 = tpu.matmul %1, %2, %cst {dimension_numbers = #tpu.dot_dimension_numbers<[1], [0], [0], [1], [0, 0, 1, 1], [], []>} : vector<128x128xbf16>, vector<128x64xbf16>, vector<128x64xf32> -> vector<128x64xf32>
    %c0_3 = arith.constant 0 : index
    %c0_4 = arith.constant 0 : index
    %4 = vector.load %arg3[%c0_3, %c0_4] : memref<1x64xf32, #tpu.memory_space<vmem>>, vector<1x64xf32>
    %5 = vector.broadcast %4 : vector<1x64xf32> to vector<128x64xf32>
    %6 = arith.addf %3, %5 : vector<128x64xf32>
    %c0_5 = arith.constant 0 : index
    %c0_6 = arith.constant 0 : index
    %7 = vector.load %arg4[%c0_5, %c0_6] : memref<128x64xf32, #tpu.memory_space<vmem>>, vector<128x64xf32>
    tpu.vector_store %arg4[%c0_5, %c0_6], %6 {strides = array<i32>} : memref<128x64xf32, #tpu.memory_space<vmem>>, vector<128x64xf32>,
    return
  }
  func.func @transform_0(%arg0: i32) -> (i32, i32) {
    %c0_i32 = arith.constant 0 : i32
    %c0_i32_0 = arith.constant 0 : i32
    return %arg0, %c0_i32 : i32, i32
  }
  func.func @transform_1(%arg0: i32) -> (i32, i32) {
    %c0_i32 = arith.constant 0 : i32
    %c0_i32_0 = arith.constant 0 : i32
    %c0_i32_1 = arith.constant 0 : i32
    return %c0_i32, %c0_i32_0 : i32, i32
  }
  func.func @transform_2(%arg0: i32) -> (i32, i32) {
    %c0_i32 = arith.constant 0 : i32
    %c0_i32_0 = arith.constant 0 : i32
    %c0_i32_1 = arith.constant 0 : i32
    return %c0_i32, %c0_i32_0 : i32, i32
  }
  func.func @transform_3(%arg0: i32) -> (i32, i32) {
    %c0_i32 = arith.constant 0 : i32
    %c0_i32_0 = arith.constant 0 : i32
    return %arg0, %c0_i32 : i32, i32
  }
}

module attributes {stable_mosaic.version = 11 : i64} {
  func.func @_resnet_kernel(%arg0: i32, %arg1: memref<128x64xf32, #tpu.memory_space<vmem>>, %arg2: memref<2x64xbf16, #tpu.memory_space<vmem>>, %arg3: memref<1x4x64x64xbf16, #tpu.memory_space<vmem>>, %arg4: memref<1x4x64xf32, #tpu.memory_space<vmem>>, %arg5: memref<1x4x64xf32, #tpu.memory_space<vmem>>, %arg6: memref<1x64x64xbf16, #tpu.memory_space<vmem>>, %arg7: memref<128x64xf32, #tpu.memory_space<vmem>>) attributes {dimension_semantics = [#tpu.dimension_semantics<arbitrary>], iteration_bounds = array<i64: 2>, scalar_prefetch = 0 : i64, scratch_operands = 0 : i64, tpu.core_type = #tpu.core_type<tc>, window_params = [{pipeline_mode = #tpu.pipeline_mode<synchronous>, transform_indices = @transform_0, window_bounds = array<i64: 128, 64>}, {pipeline_mode = #tpu.pipeline_mode<synchronous>, transform_indices = @transform_1, window_bounds = array<i64: 2, 64>}, {transform_indices = @transform_2, window_bounds = array<i64: 1, 4, 64, 64>}, {transform_indices = @transform_3, window_bounds = array<i64: 1, 4, 64>}, {transform_indices = @transform_4, window_bounds = array<i64: 1, 4, 64>}, {transform_indices = @transform_5, window_bounds = array<i64: 1, 64, 64>}, {pipeline_mode = #tpu.pipeline_mode<synchronous>, transform_indices = @transform_6, window_bounds = array<i64: 128, 64>}]} {
    %c0_i32 = arith.constant 0 : i32
    %0 = arith.cmpi eq, %arg0, %c0_i32 : i32
    %1 = arith.extui %0 : i1 to i32
    %c0_i32_0 = arith.constant 0 : i32
    %2 = arith.cmpi ne, %1, %c0_i32_0 : i32
    scf.if %2 {
      %c0_51 = arith.constant 0 : index
      %c0_52 = arith.constant 0 : index
      %152 = vector.load %arg1[%c0_51, %c0_52] : memref<128x64xf32, #tpu.memory_space<vmem>>, vector<128x64xf32>
      %c0_53 = arith.constant 0 : index
      %c0_54 = arith.constant 0 : index
      %153 = vector.load %arg7[%c0_53, %c0_54] : memref<128x64xf32, #tpu.memory_space<vmem>>, vector<128x64xf32>
      tpu.vector_store %arg7[%c0_53, %c0_54], %152 {strides = array<i32>} : memref<128x64xf32, #tpu.memory_space<vmem>>, vector<128x64xf32>,
    } else {
    }
    %c0 = arith.constant 0 : index
    %c0_1 = arith.constant 0 : index
    %3 = vector.load %arg7[%c0, %c0_1] : memref<128x64xf32, #tpu.memory_space<vmem>>, vector<128x64xf32>
    %c0_2 = arith.constant 0 : index
    %c0_3 = arith.constant 0 : index
    %c0_4 = arith.constant 0 : index
    %c0_5 = arith.constant 0 : index
    %4 = vector.load %arg3[%c0_2, %c0_3, %c0_4, %c0_5] : memref<1x4x64x64xbf16, #tpu.memory_space<vmem>>, vector<1x4x64x64xbf16>
    %5 = vector.shape_cast %4 : vector<1x4x64x64xbf16> to vector<4x64x64xbf16>
    %c0_6 = arith.constant 0 : index
    %c0_7 = arith.constant 0 : index
    %c0_8 = arith.constant 0 : index
    %6 = vector.load %arg4[%c0_6, %c0_7, %c0_8] : memref<1x4x64xf32, #tpu.memory_space<vmem>>, vector<1x4x64xf32>
    %7 = vector.shape_cast %6 : vector<1x4x64xf32> to vector<4x64xf32>
    %c0_9 = arith.constant 0 : index
    %c0_10 = arith.constant 0 : index
    %c0_11 = arith.constant 0 : index
    %8 = vector.load %arg5[%c0_9, %c0_10, %c0_11] : memref<1x4x64xf32, #tpu.memory_space<vmem>>, vector<1x4x64xf32>
    %9 = vector.shape_cast %8 : vector<1x4x64xf32> to vector<4x64xf32>
    %10 = arith.truncf %3 : vector<128x64xf32> to vector<128x64xbf16>
    %11 = vector.extract_strided_slice %5 {offsets = [0, 0, 0], sizes = [1, 64, 64], strides = [1, 1, 1]} : vector<4x64x64xbf16> to vector<1x64x64xbf16>
    %12 = vector.shape_cast %11 : vector<1x64x64xbf16> to vector<64x64xbf16>
    %cst = arith.constant dense<0.000000e+00> : vector<128x64xf32>
    %13 = tpu.matmul %10, %12, %cst {dimension_numbers = #tpu.dot_dimension_numbers<[1], [0], [0], [1], [0, 0, 1, 1], [], []>} : vector<128x64xbf16>, vector<64x64xbf16>, vector<128x64xf32> -> vector<128x64xf32>
    %cst_12 = arith.constant dense<0.000000e+00> : vector<64xf32>
    %14 = vector.multi_reduction <add>, %13, %cst_12 [0] : vector<128x64xf32> to vector<64xf32>
    %15 = vector.shape_cast %14 : vector<64xf32> to vector<1x64xf32>
    %cst_13 = arith.constant 7.812500e-03 : f32
    %16 = vector.broadcast %cst_13 : f32 to vector<1x64xf32>
    %17 = arith.mulf %15, %16 : vector<1x64xf32>
    %18 = arith.mulf %13, %13 : vector<128x64xf32>
    %cst_14 = arith.constant dense<0.000000e+00> : vector<64xf32>
    %19 = vector.multi_reduction <add>, %18, %cst_14 [0] : vector<128x64xf32> to vector<64xf32>
    %20 = vector.shape_cast %19 : vector<64xf32> to vector<1x64xf32>
    %cst_15 = arith.constant 7.812500e-03 : f32
    %21 = vector.broadcast %cst_15 : f32 to vector<1x64xf32>
    %22 = arith.mulf %20, %21 : vector<1x64xf32>
    %23 = arith.mulf %17, %17 : vector<1x64xf32>
    %24 = arith.subf %22, %23 : vector<1x64xf32>
    %cst_16 = arith.constant 0.000000e+00 : f32
    %25 = vector.broadcast %cst_16 : f32 to vector<1x64xf32>
    %26 = arith.maximumf %24, %25 : vector<1x64xf32>
    %27 = vector.broadcast %17 : vector<1x64xf32> to vector<128x64xf32>
    %28 = arith.subf %13, %27 : vector<128x64xf32>
    %cst_17 = arith.constant 9.99999974E-6 : f32
    %29 = vector.broadcast %cst_17 : f32 to vector<1x64xf32>
    %30 = arith.addf %26, %29 : vector<1x64xf32>
    %31 = math.rsqrt %30 : vector<1x64xf32>
    %32 = vector.broadcast %31 : vector<1x64xf32> to vector<128x64xf32>
    %33 = arith.mulf %28, %32 : vector<128x64xf32>
    %34 = vector.extract_strided_slice %7 {offsets = [0, 0], sizes = [1, 64], strides = [1, 1]} : vector<4x64xf32> to vector<1x64xf32>
    %35 = vector.broadcast %34 : vector<1x64xf32> to vector<128x64xf32>
    %36 = arith.mulf %33, %35 : vector<128x64xf32>
    %37 = vector.extract_strided_slice %9 {offsets = [0, 0], sizes = [1, 64], strides = [1, 1]} : vector<4x64xf32> to vector<1x64xf32>
    %38 = vector.broadcast %37 : vector<1x64xf32> to vector<128x64xf32>
    %39 = arith.addf %36, %38 : vector<128x64xf32>
    %cst_18 = arith.constant 0.000000e+00 : f32
    %40 = vector.broadcast %cst_18 : f32 to vector<128x64xf32>
    %41 = arith.maximumf %39, %40 : vector<128x64xf32>
    %42 = arith.truncf %41 : vector<128x64xf32> to vector<128x64xbf16>
    %43 = vector.extract_strided_slice %5 {offsets = [1, 0, 0], sizes = [1, 64, 64], strides = [1, 1, 1]} : vector<4x64x64xbf16> to vector<1x64x64xbf16>
    %44 = vector.shape_cast %43 : vector<1x64x64xbf16> to vector<64x64xbf16>
    %cst_19 = arith.constant dense<0.000000e+00> : vector<128x64xf32>
    %45 = tpu.matmul %42, %44, %cst_19 {dimension_numbers = #tpu.dot_dimension_numbers<[1], [0], [0], [1], [0, 0, 1, 1], [], []>} : vector<128x64xbf16>, vector<64x64xbf16>, vector<128x64xf32> -> vector<128x64xf32>
    %cst_20 = arith.constant dense<0.000000e+00> : vector<64xf32>
    %46 = vector.multi_reduction <add>, %45, %cst_20 [0] : vector<128x64xf32> to vector<64xf32>
    %47 = vector.shape_cast %46 : vector<64xf32> to vector<1x64xf32>
    %cst_21 = arith.constant 7.812500e-03 : f32
    %48 = vector.broadcast %cst_21 : f32 to vector<1x64xf32>
    %49 = arith.mulf %47, %48 : vector<1x64xf32>
    %50 = arith.mulf %45, %45 : vector<128x64xf32>
    %cst_22 = arith.constant dense<0.000000e+00> : vector<64xf32>
    %51 = vector.multi_reduction <add>, %50, %cst_22 [0] : vector<128x64xf32> to vector<64xf32>
    %52 = vector.shape_cast %51 : vector<64xf32> to vector<1x64xf32>
    %cst_23 = arith.constant 7.812500e-03 : f32
    %53 = vector.broadcast %cst_23 : f32 to vector<1x64xf32>
    %54 = arith.mulf %52, %53 : vector<1x64xf32>
    %55 = arith.mulf %49, %49 : vector<1x64xf32>
    %56 = arith.subf %54, %55 : vector<1x64xf32>
    %cst_24 = arith.constant 0.000000e+00 : f32
    %57 = vector.broadcast %cst_24 : f32 to vector<1x64xf32>
    %58 = arith.maximumf %56, %57 : vector<1x64xf32>
    %59 = vector.broadcast %49 : vector<1x64xf32> to vector<128x64xf32>
    %60 = arith.subf %45, %59 : vector<128x64xf32>
    %cst_25 = arith.constant 9.99999974E-6 : f32
    %61 = vector.broadcast %cst_25 : f32 to vector<1x64xf32>
    %62 = arith.addf %58, %61 : vector<1x64xf32>
    %63 = math.rsqrt %62 : vector<1x64xf32>
    %64 = vector.broadcast %63 : vector<1x64xf32> to vector<128x64xf32>
    %65 = arith.mulf %60, %64 : vector<128x64xf32>
    %66 = vector.extract_strided_slice %7 {offsets = [1, 0], sizes = [1, 64], strides = [1, 1]} : vector<4x64xf32> to vector<1x64xf32>
    %67 = vector.broadcast %66 : vector<1x64xf32> to vector<128x64xf32>
    %68 = arith.mulf %65, %67 : vector<128x64xf32>
    %69 = vector.extract_strided_slice %9 {offsets = [1, 0], sizes = [1, 64], strides = [1, 1]} : vector<4x64xf32> to vector<1x64xf32>
    %70 = vector.broadcast %69 : vector<1x64xf32> to vector<128x64xf32>
    %71 = arith.addf %68, %70 : vector<128x64xf32>
    %cst_26 = arith.constant 0.000000e+00 : f32
    %72 = vector.broadcast %cst_26 : f32 to vector<128x64xf32>
    %73 = arith.maximumf %71, %72 : vector<128x64xf32>
    %74 = arith.truncf %73 : vector<128x64xf32> to vector<128x64xbf16>
    %75 = vector.extract_strided_slice %5 {offsets = [2, 0, 0], sizes = [1, 64, 64], strides = [1, 1, 1]} : vector<4x64x64xbf16> to vector<1x64x64xbf16>
    %76 = vector.shape_cast %75 : vector<1x64x64xbf16> to vector<64x64xbf16>
    %cst_27 = arith.constant dense<0.000000e+00> : vector<128x64xf32>
    %77 = tpu.matmul %74, %76, %cst_27 {dimension_numbers = #tpu.dot_dimension_numbers<[1], [0], [0], [1], [0, 0, 1, 1], [], []>} : vector<128x64xbf16>, vector<64x64xbf16>, vector<128x64xf32> -> vector<128x64xf32>
    %cst_28 = arith.constant dense<0.000000e+00> : vector<64xf32>
    %78 = vector.multi_reduction <add>, %77, %cst_28 [0] : vector<128x64xf32> to vector<64xf32>
    %79 = vector.shape_cast %78 : vector<64xf32> to vector<1x64xf32>
    %cst_29 = arith.constant 7.812500e-03 : f32
    %80 = vector.broadcast %cst_29 : f32 to vector<1x64xf32>
    %81 = arith.mulf %79, %80 : vector<1x64xf32>
    %82 = arith.mulf %77, %77 : vector<128x64xf32>
    %cst_30 = arith.constant dense<0.000000e+00> : vector<64xf32>
    %83 = vector.multi_reduction <add>, %82, %cst_30 [0] : vector<128x64xf32> to vector<64xf32>
    %84 = vector.shape_cast %83 : vector<64xf32> to vector<1x64xf32>
    %cst_31 = arith.constant 7.812500e-03 : f32
    %85 = vector.broadcast %cst_31 : f32 to vector<1x64xf32>
    %86 = arith.mulf %84, %85 : vector<1x64xf32>
    %87 = arith.mulf %81, %81 : vector<1x64xf32>
    %88 = arith.subf %86, %87 : vector<1x64xf32>
    %cst_32 = arith.constant 0.000000e+00 : f32
    %89 = vector.broadcast %cst_32 : f32 to vector<1x64xf32>
    %90 = arith.maximumf %88, %89 : vector<1x64xf32>
    %91 = vector.broadcast %81 : vector<1x64xf32> to vector<128x64xf32>
    %92 = arith.subf %77, %91 : vector<128x64xf32>
    %cst_33 = arith.constant 9.99999974E-6 : f32
    %93 = vector.broadcast %cst_33 : f32 to vector<1x64xf32>
    %94 = arith.addf %90, %93 : vector<1x64xf32>
    %95 = math.rsqrt %94 : vector<1x64xf32>
    %96 = vector.broadcast %95 : vector<1x64xf32> to vector<128x64xf32>
    %97 = arith.mulf %92, %96 : vector<128x64xf32>
    %98 = vector.extract_strided_slice %7 {offsets = [2, 0], sizes = [1, 64], strides = [1, 1]} : vector<4x64xf32> to vector<1x64xf32>
    %99 = vector.broadcast %98 : vector<1x64xf32> to vector<128x64xf32>
    %100 = arith.mulf %97, %99 : vector<128x64xf32>
    %101 = vector.extract_strided_slice %9 {offsets = [2, 0], sizes = [1, 64], strides = [1, 1]} : vector<4x64xf32> to vector<1x64xf32>
    %102 = vector.broadcast %101 : vector<1x64xf32> to vector<128x64xf32>
    %103 = arith.addf %100, %102 : vector<128x64xf32>
    %cst_34 = arith.constant 0.000000e+00 : f32
    %104 = vector.broadcast %cst_34 : f32 to vector<128x64xf32>
    %105 = arith.maximumf %103, %104 : vector<128x64xf32>
    %106 = arith.truncf %105 : vector<128x64xf32> to vector<128x64xbf16>
    %107 = vector.extract_strided_slice %5 {offsets = [3, 0, 0], sizes = [1, 64, 64], strides = [1, 1, 1]} : vector<4x64x64xbf16> to vector<1x64x64xbf16>
    %108 = vector.shape_cast %107 : vector<1x64x64xbf16> to vector<64x64xbf16>
    %cst_35 = arith.constant dense<0.000000e+00> : vector<128x64xf32>
    %109 = tpu.matmul %106, %108, %cst_35 {dimension_numbers = #tpu.dot_dimension_numbers<[1], [0], [0], [1], [0, 0, 1, 1], [], []>} : vector<128x64xbf16>, vector<64x64xbf16>, vector<128x64xf32> -> vector<128x64xf32>
    %cst_36 = arith.constant dense<0.000000e+00> : vector<64xf32>
    %110 = vector.multi_reduction <add>, %109, %cst_36 [0] : vector<128x64xf32> to vector<64xf32>
    %111 = vector.shape_cast %110 : vector<64xf32> to vector<1x64xf32>
    %cst_37 = arith.constant 7.812500e-03 : f32
    %112 = vector.broadcast %cst_37 : f32 to vector<1x64xf32>
    %113 = arith.mulf %111, %112 : vector<1x64xf32>
    %114 = arith.mulf %109, %109 : vector<128x64xf32>
    %cst_38 = arith.constant dense<0.000000e+00> : vector<64xf32>
    %115 = vector.multi_reduction <add>, %114, %cst_38 [0] : vector<128x64xf32> to vector<64xf32>
    %116 = vector.shape_cast %115 : vector<64xf32> to vector<1x64xf32>
    %cst_39 = arith.constant 7.812500e-03 : f32
    %117 = vector.broadcast %cst_39 : f32 to vector<1x64xf32>
    %118 = arith.mulf %116, %117 : vector<1x64xf32>
    %119 = arith.mulf %113, %113 : vector<1x64xf32>
    %120 = arith.subf %118, %119 : vector<1x64xf32>
    %cst_40 = arith.constant 0.000000e+00 : f32
    %121 = vector.broadcast %cst_40 : f32 to vector<1x64xf32>
    %122 = arith.maximumf %120, %121 : vector<1x64xf32>
    %123 = vector.broadcast %113 : vector<1x64xf32> to vector<128x64xf32>
    %124 = arith.subf %109, %123 : vector<128x64xf32>
    %cst_41 = arith.constant 9.99999974E-6 : f32
    %125 = vector.broadcast %cst_41 : f32 to vector<1x64xf32>
    %126 = arith.addf %122, %125 : vector<1x64xf32>
    %127 = math.rsqrt %126 : vector<1x64xf32>
    %128 = vector.broadcast %127 : vector<1x64xf32> to vector<128x64xf32>
    %129 = arith.mulf %124, %128 : vector<128x64xf32>
    %130 = vector.extract_strided_slice %7 {offsets = [3, 0], sizes = [1, 64], strides = [1, 1]} : vector<4x64xf32> to vector<1x64xf32>
    %131 = vector.broadcast %130 : vector<1x64xf32> to vector<128x64xf32>
    %132 = arith.mulf %129, %131 : vector<128x64xf32>
    %133 = vector.extract_strided_slice %9 {offsets = [3, 0], sizes = [1, 64], strides = [1, 1]} : vector<4x64xf32> to vector<1x64xf32>
    %134 = vector.broadcast %133 : vector<1x64xf32> to vector<128x64xf32>
    %135 = arith.addf %132, %134 : vector<128x64xf32>
    %cst_42 = arith.constant 0.000000e+00 : f32
    %136 = vector.broadcast %cst_42 : f32 to vector<128x64xf32>
    %137 = arith.maximumf %135, %136 : vector<128x64xf32>
    %c0_43 = arith.constant 0 : index
    %c0_44 = arith.constant 0 : index
    %138 = vector.load %arg2[%c0_43, %c0_44] : memref<2x64xbf16, #tpu.memory_space<vmem>>, vector<2x64xbf16>
    %c0_45 = arith.constant 0 : index
    %c0_46 = arith.constant 0 : index
    %c0_47 = arith.constant 0 : index
    %139 = vector.load %arg6[%c0_45, %c0_46, %c0_47] : memref<1x64x64xbf16, #tpu.memory_space<vmem>>, vector<1x64x64xbf16>
    %140 = vector.shape_cast %139 : vector<1x64x64xbf16> to vector<64x64xbf16>
    %cst_48 = arith.constant dense<0.000000e+00> : vector<2x64xf32>
    %141 = tpu.matmul %138, %140, %cst_48 {dimension_numbers = #tpu.dot_dimension_numbers<[1], [0], [0], [1], [0, 0, 1, 1], [], []>} : vector<2x64xbf16>, vector<64x64xbf16>, vector<2x64xf32> -> vector<2x64xf32>
    %142 = vector.extract_strided_slice %141 {offsets = [0, 0], sizes = [1, 64], strides = [1, 1]} : vector<2x64xf32> to vector<1x64xf32>
    %143 = vector.shape_cast %142 : vector<1x64xf32> to vector<1x64xf32>
    %144 = vector.broadcast %143 : vector<1x64xf32> to vector<64x64xf32>
    %145 = vector.extract_strided_slice %141 {offsets = [1, 0], sizes = [1, 64], strides = [1, 1]} : vector<2x64xf32> to vector<1x64xf32>
    %146 = vector.shape_cast %145 : vector<1x64xf32> to vector<1x64xf32>
    %147 = vector.broadcast %146 : vector<1x64xf32> to vector<64x64xf32>
    %148 = tpu.concatenate %144, %147 in 0 : vector<64x64xf32>, vector<64x64xf32> -> vector<128x64xf32>
    %149 = arith.addf %137, %148 : vector<128x64xf32>
    %150 = arith.addf %149, %3 : vector<128x64xf32>
    %c0_49 = arith.constant 0 : index
    %c0_50 = arith.constant 0 : index
    %151 = vector.load %arg7[%c0_49, %c0_50] : memref<128x64xf32, #tpu.memory_space<vmem>>, vector<128x64xf32>
    tpu.vector_store %arg7[%c0_49, %c0_50], %150 {strides = array<i32>} : memref<128x64xf32, #tpu.memory_space<vmem>>, vector<128x64xf32>,
    return
  }
  func.func @transform_0(%arg0: i32) -> (i32, i32) {
    %c0_i32 = arith.constant 0 : i32
    %c0_i32_0 = arith.constant 0 : i32
    %c0_i32_1 = arith.constant 0 : i32
    return %c0_i32, %c0_i32_0 : i32, i32
  }
  func.func @transform_1(%arg0: i32) -> (i32, i32) {
    %c0_i32 = arith.constant 0 : i32
    %c0_i32_0 = arith.constant 0 : i32
    %c0_i32_1 = arith.constant 0 : i32
    return %c0_i32, %c0_i32_0 : i32, i32
  }
  func.func @transform_2(%arg0: i32) -> (i32, i32, i32, i32) {
    %c0_i32 = arith.constant 0 : i32
    %c0_i32_0 = arith.constant 0 : i32
    %c0_i32_1 = arith.constant 0 : i32
    %c0_i32_2 = arith.constant 0 : i32
    return %arg0, %c0_i32, %c0_i32_0, %c0_i32_1 : i32, i32, i32, i32
  }
  func.func @transform_3(%arg0: i32) -> (i32, i32, i32) {
    %c0_i32 = arith.constant 0 : i32
    %c0_i32_0 = arith.constant 0 : i32
    %c0_i32_1 = arith.constant 0 : i32
    return %arg0, %c0_i32, %c0_i32_0 : i32, i32, i32
  }
  func.func @transform_4(%arg0: i32) -> (i32, i32, i32) {
    %c0_i32 = arith.constant 0 : i32
    %c0_i32_0 = arith.constant 0 : i32
    %c0_i32_1 = arith.constant 0 : i32
    return %arg0, %c0_i32, %c0_i32_0 : i32, i32, i32
  }
  func.func @transform_5(%arg0: i32) -> (i32, i32, i32) {
    %c0_i32 = arith.constant 0 : i32
    %c0_i32_0 = arith.constant 0 : i32
    %c0_i32_1 = arith.constant 0 : i32
    return %arg0, %c0_i32, %c0_i32_0 : i32, i32, i32
  }
  func.func @transform_6(%arg0: i32) -> (i32, i32) {
    %c0_i32 = arith.constant 0 : i32
    %c0_i32_0 = arith.constant 0 : i32
    %c0_i32_1 = arith.constant 0 : i32
    return %c0_i32, %c0_i32_0 : i32, i32
  }
}

module attributes {stable_mosaic.version = 11 : i64} {
  func.func @_head_skip_kernel(%arg0: i32, %arg1: memref<128x64xf32, #tpu.memory_space<vmem>>, %arg2: memref<128x128xf32, #tpu.memory_space<vmem>>, %arg3: memref<64x128xbf16, #tpu.memory_space<vmem>>, %arg4: memref<1x128xf32, #tpu.memory_space<vmem>>, %arg5: memref<128x128xf32, #tpu.memory_space<vmem>>) attributes {dimension_semantics = [#tpu.dimension_semantics<parallel>], iteration_bounds = array<i64: 1>, scalar_prefetch = 0 : i64, scratch_operands = 0 : i64, tpu.core_type = #tpu.core_type<tc>, window_params = [{transform_indices = @transform_0, window_bounds = array<i64: 128, 64>}, {transform_indices = @transform_1, window_bounds = array<i64: 128, 128>}, {pipeline_mode = #tpu.pipeline_mode<synchronous>, transform_indices = @transform_2, window_bounds = array<i64: 64, 128>}, {pipeline_mode = #tpu.pipeline_mode<synchronous>, transform_indices = @transform_3, window_bounds = array<i64: 1, 128>}, {transform_indices = @transform_4, window_bounds = array<i64: 128, 128>}]} {
    %c0 = arith.constant 0 : index
    %c0_0 = arith.constant 0 : index
    %0 = vector.load %arg1[%c0, %c0_0] : memref<128x64xf32, #tpu.memory_space<vmem>>, vector<128x64xf32>
    %1 = arith.truncf %0 : vector<128x64xf32> to vector<128x64xbf16>
    %c0_1 = arith.constant 0 : index
    %c0_2 = arith.constant 0 : index
    %2 = vector.load %arg3[%c0_1, %c0_2] : memref<64x128xbf16, #tpu.memory_space<vmem>>, vector<64x128xbf16>
    %cst = arith.constant dense<0.000000e+00> : vector<128x128xf32>
    %3 = tpu.matmul %1, %2, %cst {dimension_numbers = #tpu.dot_dimension_numbers<[1], [0], [0], [1], [0, 0, 1, 1], [], []>} : vector<128x64xbf16>, vector<64x128xbf16>, vector<128x128xf32> -> vector<128x128xf32>
    %c0_3 = arith.constant 0 : index
    %c0_4 = arith.constant 0 : index
    %4 = vector.load %arg4[%c0_3, %c0_4] : memref<1x128xf32, #tpu.memory_space<vmem>>, vector<1x128xf32>
    %5 = vector.broadcast %4 : vector<1x128xf32> to vector<128x128xf32>
    %6 = arith.addf %3, %5 : vector<128x128xf32>
    %c0_5 = arith.constant 0 : index
    %c0_6 = arith.constant 0 : index
    %7 = vector.load %arg2[%c0_5, %c0_6] : memref<128x128xf32, #tpu.memory_space<vmem>>, vector<128x128xf32>
    %8 = arith.addf %7, %6 : vector<128x128xf32>
    %c0_7 = arith.constant 0 : index
    %c0_8 = arith.constant 0 : index
    %9 = vector.load %arg5[%c0_7, %c0_8] : memref<128x128xf32, #tpu.memory_space<vmem>>, vector<128x128xf32>
    tpu.vector_store %arg5[%c0_7, %c0_8], %8 {strides = array<i32>} : memref<128x128xf32, #tpu.memory_space<vmem>>, vector<128x128xf32>,
    return
  }
  func.func @transform_0(%arg0: i32) -> (i32, i32) {
    %c0_i32 = arith.constant 0 : i32
    %c0_i32_0 = arith.constant 0 : i32
    return %arg0, %c0_i32 : i32, i32
  }
  func.func @transform_1(%arg0: i32) -> (i32, i32) {
    %c0_i32 = arith.constant 0 : i32
    %c0_i32_0 = arith.constant 0 : i32
    return %arg0, %c0_i32 : i32, i32
  }
  func.func @transform_2(%arg0: i32) -> (i32, i32) {
    %c0_i32 = arith.constant 0 : i32
    %c0_i32_0 = arith.constant 0 : i32
    %c0_i32_1 = arith.constant 0 : i32
    return %c0_i32, %c0_i32_0 : i32, i32
  }
  func.func @transform_3(%arg0: i32) -> (i32, i32) {
    %c0_i32 = arith.constant 0 : i32
    %c0_i32_0 = arith.constant 0 : i32
    %c0_i32_1 = arith.constant 0 : i32
    return %c0_i32, %c0_i32_0 : i32, i32
  }
  func.func @transform_4(%arg0: i32) -> (i32, i32) {
    %c0_i32 = arith.constant 0 : i32
    %c0_i32_0 = arith.constant 0 : i32
    return %arg0, %c0_i32 : i32, i32
  }
}

</mosaic_0001>

<llo_original>
// kernel: score_net_forward.5
$region0: #{score_net_forward.5}
  #allocation0 [shape = 'u32[]', space=smem, size = 0x4, offset = 0x4, fixed_abs, tag = 'smem constant byte address 0x4 - core index']
  #allocation1 [shape = 'u32[144,128]{1,0:T(1,128)}', space=vmem, size = 0x12000, scoped, tag = 'internal scratch']
  %s0 = inlined_call_operand.vmem [shape: f32[128,64], index: 0, kind: input, shape index: {}]
  %s1 = inlined_call_operand.vmem [shape: f32[128,128], index: 1, kind: input, shape index: {}]
  %s2 = inlined_call_operand.vmem [shape: bf16[64,128], index: 2, kind: input, shape index: {}]
  %s3 = inlined_call_operand.vmem [shape: f32[1,128], index: 3, kind: input, shape index: {}]
  %s4 = inlined_call_operand.hbm [shape: f32[128,128], index: 4, kind: output, shape index: {}]
  %s5 = sld [smem:[#allocation0]]
  $region26: #{score_net_forward.5} parent=0
    _
  %s7 = ssub.s32 1, %s5
  %s8 = scalar_select 0, %s7, %s5
  $region1: #{score_net_forward.5} parent=0
    #allocation2 [shape = 'u8[65536]{0}', space=vmem, size = 0x10000, scoped, tag = 'output window, operand 0, single buffered']
    #allocation3 [shape = 's32[1]{0}', space=sflag, size = 0x4, scoped, tag = 'scoped memory for score_net_forward.5']
    %9 = vsyncpa [#allocation3], 0
    // Predicated region
    $region2: #{score_net_forward.5} parent=1 // pred_check
      _
    $region3: #{score_net_forward.5} parent=1 // pred_check_branch
      %11 = sbr.rel (0) target = $region5
    $region4: #{score_net_forward.5} parent=1 // pred_region
      _
    $region5: #{score_net_forward.5} parent=1 // pred_fallthru
      _
    // Predicated region
    $region6: #{score_net_forward.5} parent=1 // pred_check
      _
    $region7: #{score_net_forward.5} parent=1 // pred_check_branch
      %13 = sbr.rel (0) target = $region9
    $region8: #{score_net_forward.5} parent=1 // pred_region
      _
    $region9: #{score_net_forward.5} parent=1 // pred_fallthru
      _
    // Predicated region
    $region10: #{score_net_forward.5} parent=1 // pred_check
      _
    $region11: #{score_net_forward.5} parent=1 // pred_check_branch
      %15 = sbr.rel (0) target = $region13
    $region12: #{score_net_forward.5} parent=1 // pred_region
      _
    $region13: #{score_net_forward.5} parent=1 // pred_fallthru
      _
    // Predicated region
    $region14: #{score_net_forward.5} parent=1 // pred_check
      _
    $region15: #{score_net_forward.5} parent=1 // pred_check_branch
      %17 = sbr.rel (0) target = $region17
    $region16: #{score_net_forward.5} parent=1 // pred_region
      _
    $region17: #{score_net_forward.5} parent=1 // pred_fallthru
      _
    %v19 = vld [vmem:[%s0] sm:$0xff]
    %v20 = vld [vmem:[%s0 + $0x8] sm:$0xff]
    %v21 = vld [vmem:[%s0 + $0x10] sm:$0xff]
    %v22 = vld [vmem:[%s0 + $0x18] sm:$0xff]
    %v23 = vld [vmem:[%s0 + $0x20] sm:$0xff]
    %v24 = vld [vmem:[%s0 + $0x28] sm:$0xff]
    %v25 = vld [vmem:[%s0 + $0x30] sm:$0xff]
    %v26 = vld [vmem:[%s0 + $0x38] sm:$0xff]
    %v27 = vld [vmem:[%s0 + $0x40] sm:$0xff]
    %v28 = vld [vmem:[%s0 + $0x48] sm:$0xff]
    %v29 = vld [vmem:[%s0 + $0x50] sm:$0xff]
    %v30 = vld [vmem:[%s0 + $0x58] sm:$0xff]
    %v31 = vld [vmem:[%s0 + $0x60] sm:$0xff]
    %v32 = vld [vmem:[%s0 + $0x68] sm:$0xff]
    %v33 = vld [vmem:[%s0 + $0x70] sm:$0xff]
    %v34 = vld [vmem:[%s0 + $0x78] sm:$0xff]
    %v35 = vpack.c.bf16 %v20, %v19
    %v36 = vpack.c.bf16 %v22, %v21
    %v37 = vpack.c.bf16 %v24, %v23
    %v38 = vpack.c.bf16 %v26, %v25
    %v39 = vpack.c.bf16 %v28, %v27
    %v40 = vpack.c.bf16 %v30, %v29
    %v41 = vpack.c.bf16 %v32, %v31
    %v42 = vpack.c.bf16 %v34, %v33
    %v43 = vld [vmem:[%s2] sm:$0xf]
    %v44 = vld [vmem:[%s2 + $0x4] sm:$0xf]
    %v45 = vld [vmem:[%s2 + $0x8] sm:$0xf]
    %v46 = vld [vmem:[%s2 + $0xc] sm:$0xf]
    %v47 = vld [vmem:[%s2 + $0x10] sm:$0xf]
    %v48 = vld [vmem:[%s2 + $0x14] sm:$0xf]
    %v49 = vld [vmem:[%s2 + $0x18] sm:$0xf]
    %v50 = vld [vmem:[%s2 + $0x1c] sm:$0xf]
    %v51 = vld [vmem:[%s3] sm:$0x1]
    %v53 = vlaneseq
    %v54 = vshrl.u32 %v53, 7
    %v55 = vsub.s32 0, %v54
    %v56 = vrot.slane %v51, %v55
    %v66 = vunpack.c.l.b16 %v43
    %v67 = vunpack.c.l.b16 %v44
    %v68 = vunpack.c.l.b16 %v45
    %v69 = vunpack.c.l.b16 %v46
    %v70 = vunpack.c.l.b16 %v47
    %v71 = vunpack.c.l.b16 %v48
    %v72 = vunpack.c.l.b16 %v49
    %v73 = vunpack.c.l.b16 %v50
    %v74 = vpack.c.b16 %v67, %v66
    %v75 = vpack.c.b16 %v69, %v68
    %v76 = vpack.c.b16 %v71, %v70
    %v77 = vpack.c.b16 %v73, %v72
    %vm82 = vcmask 523264
    %v84 = vsel %vm82, %v35, 0
    %v87 = vsel %vm82, %v36, 0
    %v90 = vsel %vm82, %v37, 0
    %v93 = vsel %vm82, %v38, 0
    %v96 = vsel %vm82, %v39, 0
    %v99 = vsel %vm82, %v40, 0
    %v102 = vsel %vm82, %v41, 0
    %v105 = vsel %vm82, %v42, 0
    %107 = vmatprep.subr.bf16.mxu0 0
    %108 = vmatpush1.bf16.msra.mxu0 0
    %109 = vmatprep.subr.bf16.mxu0 0
    %110 = vmatpush1.bf16.msra.mxu0 0
    %111 = vmatprep.subr.bf16.mxu0 0
    %112 = vmatpush1.bf16.msra.mxu0 0
    %113 = vmatprep.subr.bf16.mxu0 0
    %114 = vmatpush1.bf16.msra.mxu0 0
    %115 = vmatprep.subr.bf16.mxu0 0
    %116 = vmatpush1.bf16.msra.mxu0 %v77
    %117 = vmatprep.subr.bf16.mxu0 0
    %118 = vmatpush1.bf16.msra.mxu0 %v76
    %119 = vmatprep.subr.bf16.mxu0 0
    %120 = vmatpush1.bf16.msra.mxu0 %v75
    %121 = vmatprep.subr.bf16.mxu0 0
    %122 = vmatpush1.bf16.msra.mxu0 %v74
    %123 = vmatprep.subr.bf16.mxu0 0
    %124 = vmatpush2.bf16.msra.mxu0 0
    %125 = vmatprep.subr.bf16.mxu0 0
    %126 = vmatpush2.bf16.msra.mxu0 0
    %127 = vmatprep.subr.bf16.mxu0 0
    %128 = vmatpush2.bf16.msra.mxu0 0
    %129 = vmatprep.subr.bf16.mxu0 0
    %130 = vmatpush2.bf16.msra.mxu0 0
    %131 = vmatprep.subr.bf16.mxu0 0
    %132 = vmatpush2.bf16.msra.mxu0 0
    %133 = vmatprep.subr.bf16.mxu0 0
    %134 = vmatpush2.bf16.msra.mxu0 0
    %135 = vmatprep.subr.bf16.mxu0 0
    %136 = vmatpush2.bf16.msra.mxu0 0
    %137 = vmatprep.subr.bf16.mxu0 0
    %138 = vmatpush2.bf16.msra.mxu0 0
    %139 = vmatprep.mubr.bf16.mxu0 0
    %140 = vmatmul.mubr.bf16.gmra.mxu0 %v84
    %v141 = vpop.f32.mrf.mxu0
    %v142 = vadd.f32 %v56, %v141
    %v143 = vpop.f32.mrf.mxu0
    %v144 = vpop.f32.mrf.mxu0
    %v145 = vadd.f32 %v56, %v144
    %v146 = vpop.f32.mrf.mxu0
    %147 = vmatprep.mubr.bf16.mxu0 0
    %148 = vmatmul.mubr.bf16.gmra.mxu0 %v87
    %v149 = vpop.f32.mrf.mxu0
    %v150 = vadd.f32 %v56, %v149
    %v151 = vpop.f32.mrf.mxu0
    %v152 = vpop.f32.mrf.mxu0
    %v153 = vadd.f32 %v56, %v152
    %v154 = vpop.f32.mrf.mxu0
    %155 = vmatprep.mubr.bf16.mxu0 0
    %156 = vmatmul.mubr.bf16.gmra.mxu0 %v90
    %v157 = vpop.f32.mrf.mxu0
    %v158 = vadd.f32 %v56, %v157
    %v159 = vpop.f32.mrf.mxu0
    %v160 = vpop.f32.mrf.mxu0
    %v161 = vadd.f32 %v56, %v160
    %v162 = vpop.f32.mrf.mxu0
    %163 = vmatprep.mubr.bf16.mxu0 0
    %164 = vmatmul.mubr.bf16.gmra.mxu0 %v93
    %v165 = vpop.f32.mrf.mxu0
    %v166 = vadd.f32 %v56, %v165
    %v167 = vpop.f32.mrf.mxu0
    %v168 = vpop.f32.mrf.mxu0
    %v169 = vadd.f32 %v56, %v168
    %v170 = vpop.f32.mrf.mxu0
    %171 = vmatprep.mubr.bf16.mxu0 0
    %172 = vmatmul.mubr.bf16.gmra.mxu0 %v96
    %v173 = vpop.f32.mrf.mxu0
    %v174 = vadd.f32 %v56, %v173
    %v175 = vpop.f32.mrf.mxu0
    %v176 = vpop.f32.mrf.mxu0
    %v177 = vadd.f32 %v56, %v176
    %v178 = vpop.f32.mrf.mxu0
    %179 = vmatprep.mubr.bf16.mxu0 0
    %180 = vmatmul.mubr.bf16.gmra.mxu0 %v99
    %v181 = vpop.f32.mrf.mxu0
    %v182 = vadd.f32 %v56, %v181
    %v183 = vpop.f32.mrf.mxu0
    %v184 = vpop.f32.mrf.mxu0
    %v185 = vadd.f32 %v56, %v184
    %v186 = vpop.f32.mrf.mxu0
    %187 = vmatprep.mubr.bf16.mxu0 0
    %188 = vmatmul.mubr.bf16.gmra.mxu0 %v102
    %v189 = vpop.f32.mrf.mxu0
    %v190 = vadd.f32 %v56, %v189
    %v191 = vpop.f32.mrf.mxu0
    %v192 = vpop.f32.mrf.mxu0
    %v193 = vadd.f32 %v56, %v192
    %v194 = vpop.f32.mrf.mxu0
    %195 = vmatprep.mubr.bf16.mxu0 0
    %196 = vmatmul.mubr.bf16.gmra.mxu0 %v105
    %v197 = vpop.f32.mrf.mxu0
    %v198 = vadd.f32 %v56, %v197
    %v199 = vpop.f32.mrf.mxu0
    %v200 = vpop.f32.mrf.mxu0
    %v201 = vadd.f32 %v56, %v200
    %v202 = vpop.f32.mrf.mxu0
    %203 = vdwg.mxu0
    %v204 = vld [vmem:[%s1] sm:$0xff]
    %v205 = vld [vmem:[%s1 + $0x8] sm:$0xff]
    %v206 = vld [vmem:[%s1 + $0x10] sm:$0xff]
    %v207 = vld [vmem:[%s1 + $0x18] sm:$0xff]
    %v208 = vld [vmem:[%s1 + $0x20] sm:$0xff]
    %v209 = vld [vmem:[%s1 + $0x28] sm:$0xff]
    %v210 = vld [vmem:[%s1 + $0x30] sm:$0xff]
    %v211 = vld [vmem:[%s1 + $0x38] sm:$0xff]
    %v212 = vld [vmem:[%s1 + $0x40] sm:$0xff]
    %v213 = vld [vmem:[%s1 + $0x48] sm:$0xff]
    %v214 = vld [vmem:[%s1 + $0x50] sm:$0xff]
    %v215 = vld [vmem:[%s1 + $0x58] sm:$0xff]
    %v216 = vld [vmem:[%s1 + $0x60] sm:$0xff]
    %v217 = vld [vmem:[%s1 + $0x68] sm:$0xff]
    %v218 = vld [vmem:[%s1 + $0x70] sm:$0xff]
    %v219 = vld [vmem:[%s1 + $0x78] sm:$0xff]
    %v220 = vadd.f32 %v204, %v142
    %v221 = vadd.f32 %v205, %v145
    %v222 = vadd.f32 %v206, %v150
    %v223 = vadd.f32 %v207, %v153
    %v224 = vadd.f32 %v208, %v158
    %v225 = vadd.f32 %v209, %v161
    %v226 = vadd.f32 %v210, %v166
    %v227 = vadd.f32 %v211, %v169
    %v228 = vadd.f32 %v212, %v174
    %v229 = vadd.f32 %v213, %v177
    %v230 = vadd.f32 %v214, %v182
    %v231 = vadd.f32 %v215, %v185
    %v232 = vadd.f32 %v216, %v190
    %v233 = vadd.f32 %v217, %v193
    %v234 = vadd.f32 %v218, %v198
    %v235 = vadd.f32 %v219, %v201
    %236 = vst [vmem:[#allocation2] sm:$0xff] %v220
    %237 = vst [vmem:[#allocation2 + $0x8] sm:$0xff] %v221
    %238 = vst [vmem:[#allocation2 + $0x10] sm:$0xff] %v222
    %239 = vst [vmem:[#allocation2 + $0x18] sm:$0xff] %v223
    %240 = vst [vmem:[#allocation2 + $0x20] sm:$0xff] %v224
    %241 = vst [vmem:[#allocation2 + $0x28] sm:$0xff] %v225
    %242 = vst [vmem:[#allocation2 + $0x30] sm:$0xff] %v226
    %243 = vst [vmem:[#allocation2 + $0x38] sm:$0xff] %v227
    %244 = vst [vmem:[#allocation2 + $0x40] sm:$0xff] %v228
    %245 = vst [vmem:[#allocation2 + $0x48] sm:$0xff] %v229
    %246 = vst [vmem:[#allocation2 + $0x50] sm:$0xff] %v230
    %247 = vst [vmem:[#allocation2 + $0x58] sm:$0xff] %v231
    %248 = vst [vmem:[#allocation2 + $0x60] sm:$0xff] %v232
    %249 = vst [vmem:[#allocation2 + $0x68] sm:$0xff] %v233
    %250 = vst [vmem:[#allocation2 + $0x70] sm:$0xff] %v234
    %251 = vst [vmem:[#allocation2 + $0x78] sm:$0xff] %v235
    // Predicated region
    $region18: #{score_net_forward.5} parent=1 // pred_check
      _
    $region19: #{score_net_forward.5} parent=1 // pred_check_branch
      %253 = sbr.rel (0) target = $region21
    $region20: #{score_net_forward.5} parent=1 // pred_region
      %s255 = ssub.s32 2048, 2048
      %256 = vsyncadd [#allocation3], %s255
      %s257 = sshll.u32 [#allocation2], 4
      %s258 = int_to_ptr.vmem [resolvable:$true] %s257
      %263 = dma.vmem_to_hbm [thread:$0]  %s258, 2048, %s4, [#allocation3], 128, 128, 8
    $region21: #{score_net_forward.5} parent=1 // pred_fallthru
      _
    // Predicated region
    $region22: #{score_net_forward.5} parent=1 // pred_check
      _
    $region23: #{score_net_forward.5} parent=1 // pred_check_branch
      %265 = sbr.rel (0) target = $region25
    $region24: #{score_net_forward.5} parent=1 // pred_region
      %266 = dma.done [#allocation3], 2048
    $region25: #{score_net_forward.5} parent=1 // pred_fallthru
      _
    %267 = vsyncpa [#allocation3], 1

// kernel: score_net_forward.3
$region0: #{score_net_forward.3}
  #allocation0 [shape = 'u32[]', space=smem, size = 0x4, offset = 0x4, fixed_abs, tag = 'smem constant byte address 0x4 - core index']
  #allocation1 [shape = 'u32[144,128]{1,0:T(1,128)}', space=vmem, size = 0x12000, scoped, tag = 'internal scratch']
  %s0 = inlined_call_operand.vmem [shape: f32[128,128], index: 0, kind: input, shape index: {}]
  %s1 = inlined_call_operand.vmem [shape: bf16[128,64], index: 1, kind: input, shape index: {}]
  %s2 = inlined_call_operand.vmem [shape: f32[1,64], index: 2, kind: input, shape index: {}]
  %s3 = inlined_call_operand.vmem [shape: f32[128,64], index: 3, kind: output, shape index: {}]
  %s4 = sld [smem:[#allocation0]]
  $region22: #{score_net_forward.3} parent=0
    _
  %s6 = ssub.s32 1, %s4
  %s7 = scalar_select 0, %s6, %s4
  // Predicated region
  $region2: #{score_net_forward.3} parent=0 // pred_check
    _
  $region3: #{score_net_forward.3} parent=0 // pred_check_branch
    %9 = sbr.rel (0) target = $region5
  $region4: #{score_net_forward.3} parent=0 // pred_region
    _
  $region5: #{score_net_forward.3} parent=0 // pred_fallthru
    _
  // Predicated region
  $region6: #{score_net_forward.3} parent=0 // pred_check
    _
  $region7: #{score_net_forward.3} parent=0 // pred_check_branch
    %11 = sbr.rel (0) target = $region9
  $region8: #{score_net_forward.3} parent=0 // pred_region
    _
  $region9: #{score_net_forward.3} parent=0 // pred_fallthru
    _
  // Predicated region
  $region10: #{score_net_forward.3} parent=0 // pred_check
    _
  $region11: #{score_net_forward.3} parent=0 // pred_check_branch
    %13 = sbr.rel (0) target = $region13
  $region12: #{score_net_forward.3} parent=0 // pred_region
    _
  $region13: #{score_net_forward.3} parent=0 // pred_fallthru
    _
  %v15 = vld [vmem:[%s0] sm:$0xff]
  %v16 = vld [vmem:[%s0 + $0x8] sm:$0xff]
  %v17 = vld [vmem:[%s0 + $0x10] sm:$0xff]
  %v18 = vld [vmem:[%s0 + $0x18] sm:$0xff]
  %v19 = vld [vmem:[%s0 + $0x20] sm:$0xff]
  %v20 = vld [vmem:[%s0 + $0x28] sm:$0xff]
  %v21 = vld [vmem:[%s0 + $0x30] sm:$0xff]
  %v22 = vld [vmem:[%s0 + $0x38] sm:$0xff]
  %v23 = vld [vmem:[%s0 + $0x40] sm:$0xff]
  %v24 = vld [vmem:[%s0 + $0x48] sm:$0xff]
  %v25 = vld [vmem:[%s0 + $0x50] sm:$0xff]
  %v26 = vld [vmem:[%s0 + $0x58] sm:$0xff]
  %v27 = vld [vmem:[%s0 + $0x60] sm:$0xff]
  %v28 = vld [vmem:[%s0 + $0x68] sm:$0xff]
  %v29 = vld [vmem:[%s0 + $0x70] sm:$0xff]
  %v30 = vld [vmem:[%s0 + $0x78] sm:$0xff]
  %v31 = vpack.c.bf16 %v16, %v15
  %v32 = vpack.c.bf16 %v18, %v17
  %v33 = vpack.c.bf16 %v20, %v19
  %v34 = vpack.c.bf16 %v22, %v21
  %v35 = vpack.c.bf16 %v24, %v23
  %v36 = vpack.c.bf16 %v26, %v25
  %v37 = vpack.c.bf16 %v28, %v27
  %v38 = vpack.c.bf16 %v30, %v29
  %v39 = vld [vmem:[%s1] sm:$0xf]
  %v40 = vld [vmem:[%s1 + $0x4] sm:$0xf]
  %v41 = vld [vmem:[%s1 + $0x8] sm:$0xf]
  %v42 = vld [vmem:[%s1 + $0xc] sm:$0xf]
  %v43 = vld [vmem:[%s1 + $0x10] sm:$0xf]
  %v44 = vld [vmem:[%s1 + $0x14] sm:$0xf]
  %v45 = vld [vmem:[%s1 + $0x18] sm:$0xf]
  %v46 = vld [vmem:[%s1 + $0x1c] sm:$0xf]
  %v47 = vld [vmem:[%s1 + $0x20] sm:$0xf]
  %v48 = vld [vmem:[%s1 + $0x24] sm:$0xf]
  %v49 = vld [vmem:[%s1 + $0x28] sm:$0xf]
  %v50 = vld [vmem:[%s1 + $0x2c] sm:$0xf]
  %v51 = vld [vmem:[%s1 + $0x30] sm:$0xf]
  %v52 = vld [vmem:[%s1 + $0x34] sm:$0xf]
  %v53 = vld [vmem:[%s1 + $0x38] sm:$0xf]
  %v54 = vld [vmem:[%s1 + $0x3c] sm:$0xf]
  %v55 = vld [vmem:[%s2] sm:$0x1]
  %v57 = vlaneseq
  %v58 = vshrl.u32 %v57, 7
  %v59 = vsub.s32 0, %v58
  %v60 = vrot.slane %v55, %v59
  %v78 = vunpack.c.l.b16 %v39
  %v79 = vunpack.c.l.b16 %v40
  %v80 = vunpack.c.l.b16 %v41
  %v81 = vunpack.c.l.b16 %v42
  %v82 = vunpack.c.l.b16 %v43
  %v83 = vunpack.c.l.b16 %v44
  %v84 = vunpack.c.l.b16 %v45
  %v85 = vunpack.c.l.b16 %v46
  %v86 = vunpack.c.l.b16 %v47
  %v87 = vunpack.c.l.b16 %v48
  %v88 = vunpack.c.l.b16 %v49
  %v89 = vunpack.c.l.b16 %v50
  %v90 = vunpack.c.l.b16 %v51
  %v91 = vunpack.c.l.b16 %v52
  %v92 = vunpack.c.l.b16 %v53
  %v93 = vunpack.c.l.b16 %v54
  %v94 = vpack.c.b16 %v79, %v78
  %v95 = vpack.c.b16 %v81, %v80
  %v96 = vpack.c.b16 %v83, %v82
  %v97 = vpack.c.b16 %v85, %v84
  %v98 = vpack.c.b16 %v87, %v86
  %v99 = vpack.c.b16 %v89, %v88
  %v100 = vpack.c.b16 %v91, %v90
  %v101 = vpack.c.b16 %v93, %v92
  %110 = vmatprep.subr.bf16.mxu0 0
  %111 = vmatpush1.bf16.msra.mxu0 %v101
  %112 = vmatprep.subr.bf16.mxu0 0
  %113 = vmatpush1.bf16.msra.mxu0 %v100
  %114 = vmatprep.subr.bf16.mxu0 0
  %115 = vmatpush1.bf16.msra.mxu0 %v99
  %116 = vmatprep.subr.bf16.mxu0 0
  %117 = vmatpush1.bf16.msra.mxu0 %v98
  %118 = vmatprep.subr.bf16.mxu0 0
  %119 = vmatpush1.bf16.msra.mxu0 %v97
  %120 = vmatprep.subr.bf16.mxu0 0
  %121 = vmatpush1.bf16.msra.mxu0 %v96
  %122 = vmatprep.subr.bf16.mxu0 0
  %123 = vmatpush1.bf16.msra.mxu0 %v95
  %124 = vmatprep.subr.bf16.mxu0 0
  %125 = vmatpush1.bf16.msra.mxu0 %v94
  %126 = vmatprep.subr.bf16.mxu0 0
  %127 = vmatpush2.bf16.msra.mxu0 0
  %128 = vmatprep.subr.bf16.mxu0 0
  %129 = vmatpush2.bf16.msra.mxu0 0
  %130 = vmatprep.subr.bf16.mxu0 0
  %131 = vmatpush2.bf16.msra.mxu0 0
  %132 = vmatprep.subr.bf16.mxu0 0
  %133 = vmatpush2.bf16.msra.mxu0 0
  %134 = vmatprep.subr.bf16.mxu0 0
  %135 = vmatpush2.bf16.msra.mxu0 0
  %136 = vmatprep.subr.bf16.mxu0 0
  %137 = vmatpush2.bf16.msra.mxu0 0
  %138 = vmatprep.subr.bf16.mxu0 0
  %139 = vmatpush2.bf16.msra.mxu0 0
  %140 = vmatprep.subr.bf16.mxu0 0
  %141 = vmatpush2.bf16.msra.mxu0 0
  %142 = vmatprep.mubr.bf16.mxu0 0
  %143 = vmatmul.mubr.bf16.gmra.mxu0 %v31
  %v144 = vpop.f32.mrf.mxu0
  %v145 = vadd.f32 %v60, %v144
  %v146 = vpop.f32.mrf.mxu0
  %v147 = vpop.f32.mrf.mxu0
  %v148 = vadd.f32 %v60, %v147
  %v149 = vpop.f32.mrf.mxu0
  %150 = vmatprep.mubr.bf16.mxu0 0
  %151 = vmatmul.mubr.bf16.gmra.mxu0 %v32
  %v152 = vpop.f32.mrf.mxu0
  %v153 = vadd.f32 %v60, %v152
  %v154 = vpop.f32.mrf.mxu0
  %v155 = vpop.f32.mrf.mxu0
  %v156 = vadd.f32 %v60, %v155
  %v157 = vpop.f32.mrf.mxu0
  %158 = vmatprep.mubr.bf16.mxu0 0
  %159 = vmatmul.mubr.bf16.gmra.mxu0 %v33
  %v160 = vpop.f32.mrf.mxu0
  %v161 = vadd.f32 %v60, %v160
  %v162 = vpop.f32.mrf.mxu0
  %v163 = vpop.f32.mrf.mxu0
  %v164 = vadd.f32 %v60, %v163
  %v165 = vpop.f32.mrf.mxu0
  %166 = vmatprep.mubr.bf16.mxu0 0
  %167 = vmatmul.mubr.bf16.gmra.mxu0 %v34
  %v168 = vpop.f32.mrf.mxu0
  %v169 = vadd.f32 %v60, %v168
  %v170 = vpop.f32.mrf.mxu0
  %v171 = vpop.f32.mrf.mxu0
  %v172 = vadd.f32 %v60, %v171
  %v173 = vpop.f32.mrf.mxu0
  %174 = vmatprep.mubr.bf16.mxu0 0
  %175 = vmatmul.mubr.bf16.gmra.mxu0 %v35
  %v176 = vpop.f32.mrf.mxu0
  %v177 = vadd.f32 %v60, %v176
  %v178 = vpop.f32.mrf.mxu0
  %v179 = vpop.f32.mrf.mxu0
  %v180 = vadd.f32 %v60, %v179
  %v181 = vpop.f32.mrf.mxu0
  %182 = vmatprep.mubr.bf16.mxu0 0
  %183 = vmatmul.mubr.bf16.gmra.mxu0 %v36
  %v184 = vpop.f32.mrf.mxu0
  %v185 = vadd.f32 %v60, %v184
  %v186 = vpop.f32.mrf.mxu0
  %v187 = vpop.f32.mrf.mxu0
  %v188 = vadd.f32 %v60, %v187
  %v189 = vpop.f32.mrf.mxu0
  %190 = vmatprep.mubr.bf16.mxu0 0
  %191 = vmatmul.mubr.bf16.gmra.mxu0 %v37
  %v192 = vpop.f32.mrf.mxu0
  %v193 = vadd.f32 %v60, %v192
  %v194 = vpop.f32.mrf.mxu0
  %v195 = vpop.f32.mrf.mxu0
  %v196 = vadd.f32 %v60, %v195
  %v197 = vpop.f32.mrf.mxu0
  %198 = vmatprep.mubr.bf16.mxu0 0
  %199 = vmatmul.mubr.bf16.gmra.mxu0 %v38
  %v200 = vpop.f32.mrf.mxu0
  %v201 = vadd.f32 %v60, %v200
  %v202 = vpop.f32.mrf.mxu0
  %v203 = vpop.f32.mrf.mxu0
  %v204 = vadd.f32 %v60, %v203
  %v205 = vpop.f32.mrf.mxu0
  %206 = vdwg.mxu0
  %vm207 = vcmask 523264
  %208 = vst.msk [vmem:[%s3] sm:$0xff] %vm207, %v145
  %209 = vst.msk [vmem:[%s3 + $0x8] sm:$0xff] %vm207, %v148
  %210 = vst.msk [vmem:[%s3 + $0x10] sm:$0xff] %vm207, %v153
  %211 = vst.msk [vmem:[%s3 + $0x18] sm:$0xff] %vm207, %v156
  %212 = vst.msk [vmem:[%s3 + $0x20] sm:$0xff] %vm207, %v161
  %213 = vst.msk [vmem:[%s3 + $0x28] sm:$0xff] %vm207, %v164
  %214 = vst.msk [vmem:[%s3 + $0x30] sm:$0xff] %vm207, %v169
  %215 = vst.msk [vmem:[%s3 + $0x38] sm:$0xff] %vm207, %v172
  %216 = vst.msk [vmem:[%s3 + $0x40] sm:$0xff] %vm207, %v177
  %217 = vst.msk [vmem:[%s3 + $0x48] sm:$0xff] %vm207, %v180
  %218 = vst.msk [vmem:[%s3 + $0x50] sm:$0xff] %vm207, %v185
  %219 = vst.msk [vmem:[%s3 + $0x58] sm:$0xff] %vm207, %v188
  %220 = vst.msk [vmem:[%s3 + $0x60] sm:$0xff] %vm207, %v193
  %221 = vst.msk [vmem:[%s3 + $0x68] sm:$0xff] %vm207, %v196
  %222 = vst.msk [vmem:[%s3 + $0x70] sm:$0xff] %vm207, %v201
  %223 = vst.msk [vmem:[%s3 + $0x78] sm:$0xff] %vm207, %v204
  // Predicated region
  $region14: #{score_net_forward.3} parent=0 // pred_check
    _
  $region15: #{score_net_forward.3} parent=0 // pred_check_branch
    %225 = sbr.rel (0) target = $region17
  $region16: #{score_net_forward.3} parent=0 // pred_region
    _
  $region17: #{score_net_forward.3} parent=0 // pred_fallthru
    _
  // Predicated region
  $region18: #{score_net_forward.3} parent=0 // pred_check
    _
  $region19: #{score_net_forward.3} parent=0 // pred_check_branch
    %227 = sbr.rel (0) target = $region21
  $region20: #{score_net_forward.3} parent=0 // pred_region
    _
  $region21: #{score_net_forward.3} parent=0 // pred_fallthru
    _

// kernel: score_net_forward.4
$region0: #{score_net_forward.4}
  #allocation0 [shape = 'u32[]', space=smem, size = 0x4, offset = 0x4, fixed_abs, tag = 'smem constant byte address 0x4 - core index']
  #allocation1 [shape = 'u32[144,128]{1,0:T(1,128)}', space=vmem, size = 0x12000, scoped, tag = 'internal scratch']
  %s0 = inlined_call_operand.vmem [shape: f32[128,64], index: 0, kind: input, shape index: {}]
  %s1 = inlined_call_operand.vmem [shape: bf16[2,64], index: 1, kind: input, shape index: {}]
  %s2 = inlined_call_operand.vmem [shape: bf16[2,4,64,64], index: 2, kind: input, shape index: {}]
  %s3 = inlined_call_operand.vmem [shape: f32[2,4,64], index: 3, kind: input, shape index: {}]
  %s4 = inlined_call_operand.vmem [shape: f32[2,4,64], index: 4, kind: input, shape index: {}]
  %s5 = inlined_call_operand.vmem [shape: bf16[2,64,64], index: 5, kind: input, shape index: {}]
  %s6 = inlined_call_operand.vmem [shape: f32[128,64], index: 6, kind: output, shape index: {}]
  %s7 = sld [smem:[#allocation0]]
  $region61: #{score_net_forward.4} parent=0
    _
  %s9 = ssub.s32 1, %s7
  %s10 = scalar_select 0, %s9, %s7
  loop: start=0, step=1, limit=4
  $region2: #{score_net_forward.4} parent=0 // loop_pre_header
    _
  $region3: #{score_net_forward.4} parent=0 // loop_header
    %s12 = sphi 0, %s16
    %p13 = scmp.ge.s32.totalorder %s12, 4
    %s20 = sphi 0, %s20
    %s22 = sphi 0, %s20
    %s23 = sphi 0, %s22
    %s37 = sphi 0, %s23
    %s41 = sphi 0, %s41
    %s43 = sphi 0, %s41
    %s44 = sphi 0, %s43
    %s58 = sphi 0, %s44
    %s64 = sphi 0, %s66
    %s67 = sphi 0, %s64
    %s68 = sphi 0, %s67
    %s84 = sphi 0, %s68
    %s90 = sphi 0, %s92
    %s93 = sphi 0, %s90
    %s94 = sphi 0, %s93
    %s110 = sphi 0, %s94
    %s116 = sphi 0, %s118
    %s119 = sphi 0, %s116
    %s120 = sphi 0, %s119
    %s136 = sphi 0, %s120
    %s142 = sphi 0, %s144
    %s145 = sphi 0, %s142
    %s146 = sphi 0, %s145
    %s162 = sphi 0, %s146
    %s166 = sphi 0, %s166
    %s168 = sphi 0, %s166
    %s169 = sphi 0, %s168
    %s183 = sphi 0, %s169
  $region4: #{score_net_forward.4} parent=0 // loop_header_branch
    %15 = sbr.rel (%p13) target = $region8
  $region5: #{score_net_forward.4} parent=0 // loop_body
    %s17 = ssub.s32 %s12, 1
    %s18 = ssub.s32 %s12, 2
    %s19 = sadd.s32 %s12, 1
    %s21 = sadd.s32 %s20, 1
    %p24 = scmp.eq.s32.totalorder %s12, 1
    %p25 = scmp.ne.s32.totalorder %s20, %s22
    %p26 = scmp.eq.s32.totalorder %s12, 0
    %p27 = por %p25, %p26
    %p28 = scmp.ne.s32.totalorder %s20, %s22
    %p29 = scmp.eq.s32.totalorder %s17, 1
    %p30 = por %p28, %p29
    %p31 = scmp.ne.s32.totalorder %s22, %s23
    %p32 = scmp.eq.s32.totalorder %s17, 0
    %p33 = por %p31, %p32
    %p34 = scmp.ne.s32.totalorder %s22, %s23
    %p35 = scmp.eq.s32.totalorder %s18, 1
    %p36 = por %p34, %p35
    %p38 = scmp.ne.s32.totalorder %s23, %s37
    %p39 = scmp.eq.s32.totalorder %s18, 0
    %p40 = por %p38, %p39
    %s42 = sadd.s32 %s41, 1
    %p45 = scmp.eq.s32.totalorder %s12, 1
    %p46 = scmp.ne.s32.totalorder %s41, %s43
    %p47 = scmp.eq.s32.totalorder %s12, 0
    %p48 = por %p46, %p47
    %p49 = scmp.ne.s32.totalorder %s41, %s43
    %p50 = scmp.eq.s32.totalorder %s17, 1
    %p51 = por %p49, %p50
    %p52 = scmp.ne.s32.totalorder %s43, %s44
    %p53 = scmp.eq.s32.totalorder %s17, 0
    %p54 = por %p52, %p53
    %p55 = scmp.ne.s32.totalorder %s43, %s44
    %p56 = scmp.eq.s32.totalorder %s18, 1
    %p57 = por %p55, %p56
    %p59 = scmp.ne.s32.totalorder %s44, %s58
    %p60 = scmp.eq.s32.totalorder %s18, 0
    %p61 = por %p59, %p60
    %s62 = ssub.s32 %s12, %s19
    %p63 = scmp.eq.s32.totalorder %s62, 0
    %s65 = sadd.s32 %s64, 1
    %s66 = scalar_select %p63, %s64, %s65
    %p69 = pneg %p63
    %p70 = scmp.eq.s32.totalorder %s12, 1
    %p71 = por %p69, %p70
    %p72 = scmp.ne.s32.totalorder %s64, %s67
    %p73 = scmp.eq.s32.totalorder %s12, 0
    %p74 = por %p72, %p73
    %p75 = scmp.ne.s32.totalorder %s64, %s67
    %p76 = scmp.eq.s32.totalorder %s17, 1
    %p77 = por %p75, %p76
    %p78 = scmp.ne.s32.totalorder %s67, %s68
    %p79 = scmp.eq.s32.totalorder %s17, 0
    %p80 = por %p78, %p79
    %p81 = scmp.ne.s32.totalorder %s67, %s68
    %p82 = scmp.eq.s32.totalorder %s18, 1
    %p83 = por %p81, %p82
    %p85 = scmp.ne.s32.totalorder %s68, %s84
    %p86 = scmp.eq.s32.totalorder %s18, 0
    %p87 = por %p85, %p86
    %s88 = ssub.s32 %s12, %s19
    %p89 = scmp.eq.s32.totalorder %s88, 0
    %s91 = sadd.s32 %s90, 1
    %s92 = scalar_select %p89, %s90, %s91
    %p95 = pneg %p89
    %p96 = scmp.eq.s32.totalorder %s12, 1
    %p97 = por %p95, %p96
    %p98 = scmp.ne.s32.totalorder %s90, %s93
    %p99 = scmp.eq.s32.totalorder %s12, 0
    %p100 = por %p98, %p99
    %p101 = scmp.ne.s32.totalorder %s90, %s93
    %p102 = scmp.eq.s32.totalorder %s17, 1
    %p103 = por %p101, %p102
    %p104 = scmp.ne.s32.totalorder %s93, %s94
    %p105 = scmp.eq.s32.totalorder %s17, 0
    %p106 = por %p104, %p105
    %p107 = scmp.ne.s32.totalorder %s93, %s94
    %p108 = scmp.eq.s32.totalorder %s18, 1
    %p109 = por %p107, %p108
    %p111 = scmp.ne.s32.totalorder %s94, %s110
    %p112 = scmp.eq.s32.totalorder %s18, 0
    %p113 = por %p111, %p112
    %s114 = ssub.s32 %s12, %s19
    %p115 = scmp.eq.s32.totalorder %s114, 0
    %s117 = sadd.s32 %s116, 1
    %s118 = scalar_select %p115, %s116, %s117
    %p121 = pneg %p115
    %p122 = scmp.eq.s32.totalorder %s12, 1
    %p123 = por %p121, %p122
    %p124 = scmp.ne.s32.totalorder %s116, %s119
    %p125 = scmp.eq.s32.totalorder %s12, 0
    %p126 = por %p124, %p125
    %p127 = scmp.ne.s32.totalorder %s116, %s119
    %p128 = scmp.eq.s32.totalorder %s17, 1
    %p129 = por %p127, %p128
    %p130 = scmp.ne.s32.totalorder %s119, %s120
    %p131 = scmp.eq.s32.totalorder %s17, 0
    %p132 = por %p130, %p131
    %p133 = scmp.ne.s32.totalorder %s119, %s120
    %p134 = scmp.eq.s32.totalorder %s18, 1
    %p135 = por %p133, %p134
    %p137 = scmp.ne.s32.totalorder %s120, %s136
    %p138 = scmp.eq.s32.totalorder %s18, 0
    %p139 = por %p137, %p138
    %s140 = ssub.s32 %s12, %s19
    %p141 = scmp.eq.s32.totalorder %s140, 0
    %s143 = sadd.s32 %s142, 1
    %s144 = scalar_select %p141, %s142, %s143
    %p147 = pneg %p141
    %p148 = scmp.eq.s32.totalorder %s12, 1
    %p149 = por %p147, %p148
    %p150 = scmp.ne.s32.totalorder %s142, %s145
    %p151 = scmp.eq.s32.totalorder %s12, 0
    %p152 = por %p150, %p151
    %p153 = scmp.ne.s32.totalorder %s142, %s145
    %p154 = scmp.eq.s32.totalorder %s17, 1
    %p155 = por %p153, %p154
    %p156 = scmp.ne.s32.totalorder %s145, %s146
    %p157 = scmp.eq.s32.totalorder %s17, 0
    %p158 = por %p156, %p157
    %p159 = scmp.ne.s32.totalorder %s145, %s146
    %p160 = scmp.eq.s32.totalorder %s18, 1
    %p161 = por %p159, %p160
    %p163 = scmp.ne.s32.totalorder %s146, %s162
    %p164 = scmp.eq.s32.totalorder %s18, 0
    %p165 = por %p163, %p164
    %s167 = sadd.s32 %s166, 1
    %p170 = scmp.eq.s32.totalorder %s12, 1
    %p171 = scmp.ne.s32.totalorder %s166, %s168
    %p172 = scmp.eq.s32.totalorder %s12, 0
    %p173 = por %p171, %p172
    %p174 = scmp.ne.s32.totalorder %s166, %s168
    %p175 = scmp.eq.s32.totalorder %s17, 1
    %p176 = por %p174, %p175
    %p177 = scmp.ne.s32.totalorder %s168, %s169
    %p178 = scmp.eq.s32.totalorder %s17, 0
    %p179 = por %p177, %p178
    %p180 = scmp.ne.s32.totalorder %s168, %s169
    %p181 = scmp.eq.s32.totalorder %s18, 1
    %p182 = por %p180, %p181
    %p184 = scmp.ne.s32.totalorder %s169, %s183
    %p185 = scmp.eq.s32.totalorder %s18, 0
    %p186 = por %p184, %p185
    %p187 = scmp.le.s32.totalorder 1, %s12
    %p188 = scmp.lt.s32.totalorder %s12, 3
    %p189 = pnand %p187, %p188
    %p190 = pneg %p189
    // Predicated region
    $region9: #{score_net_forward.4} parent=5 // pred_check
      _
    $region10: #{score_net_forward.4} parent=5 // pred_check_branch
      %192 = sbr.rel (%p189) target = $region12
    $region11: #{score_net_forward.4} parent=5 // pred_region
      %s193 = ssub.s32 %s12, 1
      // Predicated region
      $region13: #{score_net_forward.4} parent=11 // pred_check
        %p194 = pneg %p33
      $region14: #{score_net_forward.4} parent=11 // pred_check_branch
        %196 = sbr.rel (%p194) target = $region16
      $region15: #{score_net_forward.4} parent=11 // pred_region
        _
      $region16: #{score_net_forward.4} parent=11 // pred_fallthru
        _
      // Predicated region
      $region17: #{score_net_forward.4} parent=11 // pred_check
        %p197 = pneg %p54
      $region18: #{score_net_forward.4} parent=11 // pred_check_branch
        %199 = sbr.rel (%p197) target = $region20
      $region19: #{score_net_forward.4} parent=11 // pred_region
        _
      $region20: #{score_net_forward.4} parent=11 // pred_fallthru
        _
    $region12: #{score_net_forward.4} parent=5 // pred_fallthru
      _
    %p200 = scmp.lt.s32.totalorder %s12, 2
    // Predicated region
    $region21: #{score_net_forward.4} parent=5 // pred_check
      %p201 = pneg %p200
    $region22: #{score_net_forward.4} parent=5 // pred_check_branch
      %203 = sbr.rel (%p201) target = $region24
    $region23: #{score_net_forward.4} parent=5 // pred_region
      // Predicated region
      $region25: #{score_net_forward.4} parent=23 // pred_check
        %p204 = pneg %p74
      $region26: #{score_net_forward.4} parent=23 // pred_check_branch
        %206 = sbr.rel (%p204) target = $region28
      $region27: #{score_net_forward.4} parent=23 // pred_region
        %p207 = scmp.lt.s32.totalorder %s12, 1
        %s208 = scalar_select %p207, %s12, 1
        %s209 = smul.addr %s208, 32
        %s210 = smul.addr %s209, 4
        %s211 = scalar_lea.vmem %s2, %s210
      $region28: #{score_net_forward.4} parent=23 // pred_fallthru
        _
      // Predicated region
      $region29: #{score_net_forward.4} parent=23 // pred_check
        %p212 = pneg %p100
      $region30: #{score_net_forward.4} parent=23 // pred_check_branch
        %214 = sbr.rel (%p212) target = $region32
      $region31: #{score_net_forward.4} parent=23 // pred_region
        %p215 = scmp.lt.s32.totalorder %s12, 1
        %s216 = scalar_select %p215, %s12, 1
        %s217 = smul.addr %s216, 4
        %s218 = scalar_lea.vmem %s3, %s217
      $region32: #{score_net_forward.4} parent=23 // pred_fallthru
        _
      // Predicated region
      $region33: #{score_net_forward.4} parent=23 // pred_check
        %p219 = pneg %p126
      $region34: #{score_net_forward.4} parent=23 // pred_check_branch
        %221 = sbr.rel (%p219) target = $region36
      $region35: #{score_net_forward.4} parent=23 // pred_region
        %p222 = scmp.lt.s32.totalorder %s12, 1
        %s223 = scalar_select %p222, %s12, 1
        %s224 = smul.addr %s223, 4
        %s225 = scalar_lea.vmem %s4, %s224
      $region36: #{score_net_forward.4} parent=23 // pred_fallthru
        _
      // Predicated region
      $region37: #{score_net_forward.4} parent=23 // pred_check
        %p226 = pneg %p152
      $region38: #{score_net_forward.4} parent=23 // pred_check_branch
        %228 = sbr.rel (%p226) target = $region40
      $region39: #{score_net_forward.4} parent=23 // pred_region
        %p229 = scmp.lt.s32.totalorder %s12, 1
        %s230 = scalar_select %p229, %s12, 1
        %s231 = smul.addr %s230, 8
        %s232 = smul.addr %s231, 4
        %s233 = scalar_lea.vmem %s5, %s232
      $region40: #{score_net_forward.4} parent=23 // pred_fallthru
        _
    $region24: #{score_net_forward.4} parent=5 // pred_fallthru
      _
    %p234 = scmp.le.s32.totalorder 1, %s12
    %p235 = scmp.lt.s32.totalorder %s12, 3
    %p236 = pnand %p234, %p235
    %p237 = pneg %p236
    // Predicated region
    $region41: #{score_net_forward.4} parent=5 // pred_check
      _
    $region42: #{score_net_forward.4} parent=5 // pred_check_branch
      %239 = sbr.rel (%p236) target = $region44
    $region43: #{score_net_forward.4} parent=5 // pred_region
      %s240 = ssub.s32 %s12, 1
      %p241 = pneg %p33
      %p242 = pneg %p30
      %p243 = pneg %p54
      %p244 = pneg %p51
      %p245 = scmp.lt.s32.totalorder %s17, 1
      %s246 = scalar_select %p245, %s17, 1
      %s247 = smul.addr %s246, 32
      %s248 = smul.addr %s247, 4
      %s249 = scalar_lea.vmem %s2, %s248
      %p250 = pneg %p80
      %p251 = pneg %p77
      %p252 = scmp.lt.s32.totalorder %s17, 1
      %s253 = scalar_select %p252, %s17, 1
      %s254 = smul.addr %s253, 4
      %s255 = scalar_lea.vmem %s3, %s254
      %p256 = pneg %p106
      %p257 = pneg %p103
      %p258 = scmp.lt.s32.totalorder %s17, 1
      %s259 = scalar_select %p258, %s17, 1
      %s260 = smul.addr %s259, 4
      %s261 = scalar_lea.vmem %s4, %s260
      %p262 = pneg %p132
      %p263 = pneg %p129
      %p264 = scmp.lt.s32.totalorder %s17, 1
      %s265 = scalar_select %p264, %s17, 1
      %s266 = smul.addr %s265, 8
      %s267 = smul.addr %s266, 4
      %s268 = scalar_lea.vmem %s5, %s267
      %p269 = pneg %p158
      %p270 = pneg %p155
      %p271 = pneg %p179
      %p272 = pneg %p176
      %p273 = scmp.lt.s32.totalorder %s17, 1
      %s274 = scalar_select %p273, %s17, 1
      %s275 = smul.addr %s274, 32
      %s276 = smul.addr %s275, 4
      %s277 = scalar_lea.vmem %s2, %s276
      %p278 = scmp.lt.s32.totalorder %s17, 1
      %s279 = scalar_select %p278, %s17, 1
      %s280 = smul.addr %s279, 4
      %s281 = scalar_lea.vmem %s3, %s280
      %p282 = scmp.lt.s32.totalorder %s17, 1
      %s283 = scalar_select %p282, %s17, 1
      %s284 = smul.addr %s283, 4
      %s285 = scalar_lea.vmem %s4, %s284
      %p286 = scmp.lt.s32.totalorder %s17, 1
      %s287 = scalar_select %p286, %s17, 1
      %s288 = smul.addr %s287, 8
      %s289 = smul.addr %s288, 4
      %s290 = scalar_lea.vmem %s5, %s289
      %p292 = scmp.eq.s32.totalorder %s17, 0
      // Predicated region
      $region45: #{score_net_forward.4} parent=43 // pred_check
        %p293 = pneg %p292
      $region46: #{score_net_forward.4} parent=43 // pred_check_branch
        %295 = sbr.rel (%p293) target = $region48
      $region47: #{score_net_forward.4} parent=43 // pred_region
        %v296 = vld [vmem:[%s0] sm:$0xff]
        %v297 = vld [vmem:[%s0 + $0x8] sm:$0xff]
        %v298 = vld [vmem:[%s0 + $0x10] sm:$0xff]
        %v299 = vld [vmem:[%s0 + $0x18] sm:$0xff]
        %v300 = vld [vmem:[%s0 + $0x20] sm:$0xff]
        %v301 = vld [vmem:[%s0 + $0x28] sm:$0xff]
        %v302 = vld [vmem:[%s0 + $0x30] sm:$0xff]
        %v303 = vld [vmem:[%s0 + $0x38] sm:$0xff]
        %v304 = vld [vmem:[%s0 + $0x40] sm:$0xff]
        %v305 = vld [vmem:[%s0 + $0x48] sm:$0xff]
        %v306 = vld [vmem:[%s0 + $0x50] sm:$0xff]
        %v307 = vld [vmem:[%s0 + $0x58] sm:$0xff]
        %v308 = vld [vmem:[%s0 + $0x60] sm:$0xff]
        %v309 = vld [vmem:[%s0 + $0x68] sm:$0xff]
        %v310 = vld [vmem:[%s0 + $0x70] sm:$0xff]
        %v311 = vld [vmem:[%s0 + $0x78] sm:$0xff]
        %vm312 = vcmask 523264
        %313 = vst.msk [vmem:[%s6] sm:$0xff] %vm312, %v296
        %314 = vst.msk [vmem:[%s6 + $0x8] sm:$0xff] %vm312, %v297
        %315 = vst.msk [vmem:[%s6 + $0x10] sm:$0xff] %vm312, %v298
        %316 = vst.msk [vmem:[%s6 + $0x18] sm:$0xff] %vm312, %v299
        %317 = vst.msk [vmem:[%s6 + $0x20] sm:$0xff] %vm312, %v300
        %318 = vst.msk [vmem:[%s6 + $0x28] sm:$0xff] %vm312, %v301
        %319 = vst.msk [vmem:[%s6 + $0x30] sm:$0xff] %vm312, %v302
        %320 = vst.msk [vmem:[%s6 + $0x38] sm:$0xff] %vm312, %v303
        %321 = vst.msk [vmem:[%s6 + $0x40] sm:$0xff] %vm312, %v304
        %322 = vst.msk [vmem:[%s6 + $0x48] sm:$0xff] %vm312, %v305
        %323 = vst.msk [vmem:[%s6 + $0x50] sm:$0xff] %vm312, %v306
        %324 = vst.msk [vmem:[%s6 + $0x58] sm:$0xff] %vm312, %v307
        %325 = vst.msk [vmem:[%s6 + $0x60] sm:$0xff] %vm312, %v308
        %326 = vst.msk [vmem:[%s6 + $0x68] sm:$0xff] %vm312, %v309
        %327 = vst.msk [vmem:[%s6 + $0x70] sm:$0xff] %vm312, %v310
        %328 = vst.msk [vmem:[%s6 + $0x78] sm:$0xff] %vm312, %v311
      $region48: #{score_net_forward.4} parent=43 // pred_fallthru
        _
      %v329 = vld [vmem:[%s6] sm:$0xff]
      %v330 = vld [vmem:[%s6 + $0x8] sm:$0xff]
      %v331 = vld [vmem:[%s6 + $0x10] sm:$0xff]
      %v332 = vld [vmem:[%s6 + $0x18] sm:$0xff]
      %v333 = vld [vmem:[%s6 + $0x20] sm:$0xff]
      %v334 = vld [vmem:[%s6 + $0x28] sm:$0xff]
      %v335 = vld [vmem:[%s6 + $0x30] sm:$0xff]
      %v336 = vld [vmem:[%s6 + $0x38] sm:$0xff]
      %v337 = vld [vmem:[%s6 + $0x40] sm:$0xff]
      %v338 = vld [vmem:[%s6 + $0x48] sm:$0xff]
      %v339 = vld [vmem:[%s6 + $0x50] sm:$0xff]
      %v340 = vld [vmem:[%s6 + $0x58] sm:$0xff]
      %v341 = vld [vmem:[%s6 + $0x60] sm:$0xff]
      %v342 = vld [vmem:[%s6 + $0x68] sm:$0xff]
      %v343 = vld [vmem:[%s6 + $0x70] sm:$0xff]
      %v344 = vld [vmem:[%s6 + $0x78] sm:$0xff]
      %v345 = vld [vmem:[%s277] sm:$0xf]
      %v346 = vld [vmem:[%s277 + $0x4] sm:$0xf]
      %v347 = vld [vmem:[%s277 + $0x8] sm:$0xf]
      %v348 = vld [vmem:[%s277 + $0xc] sm:$0xf]
      %v349 = vld [vmem:[%s277 + $0x10] sm:$0xf]
      %v350 = vld [vmem:[%s277 + $0x14] sm:$0xf]
      %v351 = vld [vmem:[%s277 + $0x18] sm:$0xf]
      %v352 = vld [vmem:[%s277 + $0x1c] sm:$0xf]
      %v353 = vld [vmem:[%s277 + $0x20] sm:$0xf]
      %v354 = vld [vmem:[%s277 + $0x24] sm:$0xf]
      %v355 = vld [vmem:[%s277 + $0x28] sm:$0xf]
      %v356 = vld [vmem:[%s277 + $0x2c] sm:$0xf]
      %v357 = vld [vmem:[%s277 + $0x30] sm:$0xf]
      %v358 = vld [vmem:[%s277 + $0x34] sm:$0xf]
      %v359 = vld [vmem:[%s277 + $0x38] sm:$0xf]
      %v360 = vld [vmem:[%s277 + $0x3c] sm:$0xf]
      %v361 = vld [vmem:[%s277 + $0x40] sm:$0xf]
      %v362 = vld [vmem:[%s277 + $0x44] sm:$0xf]
      %v363 = vld [vmem:[%s277 + $0x48] sm:$0xf]
      %v364 = vld [vmem:[%s277 + $0x4c] sm:$0xf]
      %v365 = vld [vmem:[%s277 + $0x50] sm:$0xf]
      %v366 = vld [vmem:[%s277 + $0x54] sm:$0xf]
      %v367 = vld [vmem:[%s277 + $0x58] sm:$0xf]
      %v368 = vld [vmem:[%s277 + $0x5c] sm:$0xf]
      %v369 = vld [vmem:[%s277 + $0x60] sm:$0xf]
      %v370 = vld [vmem:[%s277 + $0x64] sm:$0xf]
      %v371 = vld [vmem:[%s277 + $0x68] sm:$0xf]
      %v372 = vld [vmem:[%s277 + $0x6c] sm:$0xf]
      %v373 = vld [vmem:[%s277 + $0x70] sm:$0xf]
      %v374 = vld [vmem:[%s277 + $0x74] sm:$0xf]
      %v375 = vld [vmem:[%s277 + $0x78] sm:$0xf]
      %v376 = vld [vmem:[%s277 + $0x7c] sm:$0xf]
      %v377 = vld [vmem:[%s281] sm:$0xf]
      %v378 = vld [vmem:[%s285] sm:$0xf]
      %v379 = vpack.c.bf16 %v330, %v329
      %v380 = vpack.c.bf16 %v332, %v331
      %v381 = vpack.c.bf16 %v334, %v333
      %v382 = vpack.c.bf16 %v336, %v335
      %v383 = vpack.c.bf16 %v338, %v337
      %v384 = vpack.c.bf16 %v340, %v339
      %v385 = vpack.c.bf16 %v342, %v341
      %v386 = vpack.c.bf16 %v344, %v343
      %v395 = vunpack.c.l.b16 %v345
      %v396 = vunpack.c.l.b16 %v346
      %v397 = vunpack.c.l.b16 %v347
      %v398 = vunpack.c.l.b16 %v348
      %v399 = vunpack.c.l.b16 %v349
      %v400 = vunpack.c.l.b16 %v350
      %v401 = vunpack.c.l.b16 %v351
      %v402 = vunpack.c.l.b16 %v352
      %v403 = vpack.c.b16 %v396, %v395
      %v404 = vpack.c.b16 %v398, %v397
      %v405 = vpack.c.b16 %v400, %v399
      %v406 = vpack.c.b16 %v402, %v401
      %vm411 = vcmask 523264
      %v413 = vsel %vm411, %v379, 0
      %v416 = vsel %vm411, %v380, 0
      %v419 = vsel %vm411, %v381, 0
      %v422 = vsel %vm411, %v382, 0
      %v425 = vsel %vm411, %v383, 0
      %v428 = vsel %vm411, %v384, 0
      %v431 = vsel %vm411, %v385, 0
      %v434 = vsel %vm411, %v386, 0
      %436 = vmatprep.subr.bf16.mxu0 0
      %437 = vmatpush1.bf16.msra.mxu0 0
      %438 = vmatprep.subr.bf16.mxu0 0
      %439 = vmatpush1.bf16.msra.mxu0 0
      %440 = vmatprep.subr.bf16.mxu0 0
      %441 = vmatpush1.bf16.msra.mxu0 0
      %442 = vmatprep.subr.bf16.mxu0 0
      %443 = vmatpush1.bf16.msra.mxu0 0
      %444 = vmatprep.subr.bf16.mxu0 0
      %445 = vmatpush1.bf16.msra.mxu0 %v406
      %446 = vmatprep.subr.bf16.mxu0 0
      %447 = vmatpush1.bf16.msra.mxu0 %v405
      %448 = vmatprep.subr.bf16.mxu0 0
      %449 = vmatpush1.bf16.msra.mxu0 %v404
      %450 = vmatprep.subr.bf16.mxu0 0
      %451 = vmatpush1.bf16.msra.mxu0 %v403
      %452 = vmatprep.subr.bf16.mxu0 0
      %453 = vmatpush2.bf16.msra.mxu0 0
      %454 = vmatprep.subr.bf16.mxu0 0
      %455 = vmatpush2.bf16.msra.mxu0 0
      %456 = vmatprep.subr.bf16.mxu0 0
      %457 = vmatpush2.bf16.msra.mxu0 0
      %458 = vmatprep.subr.bf16.mxu0 0
      %459 = vmatpush2.bf16.msra.mxu0 0
      %460 = vmatprep.subr.bf16.mxu0 0
      %461 = vmatpush2.bf16.msra.mxu0 0
      %462 = vmatprep.subr.bf16.mxu0 0
      %463 = vmatpush2.bf16.msra.mxu0 0
      %464 = vmatprep.subr.bf16.mxu0 0
      %465 = vmatpush2.bf16.msra.mxu0 0
      %466 = vmatprep.subr.bf16.mxu0 0
      %467 = vmatpush2.bf16.msra.mxu0 0
      %468 = vmatprep.mubr.bf16.mxu0 0
      %469 = vmatmul.mubr.bf16.gmra.mxu0 %v413
      %v470 = vpop.f32.mrf.mxu0
      %v471 = vadd.f32 0.0, %v470
      %v472 = vpop.f32.mrf.mxu0
      %v473 = vpop.f32.mrf.mxu0
      %v474 = vadd.f32 0.0, %v473
      %v475 = vpop.f32.mrf.mxu0
      %476 = vmatprep.mubr.bf16.mxu0 0
      %477 = vmatmul.mubr.bf16.gmra.mxu0 %v416
      %v478 = vpop.f32.mrf.mxu0
      %v479 = vadd.f32 0.0, %v478
      %v480 = vpop.f32.mrf.mxu0
      %v481 = vpop.f32.mrf.mxu0
      %v482 = vadd.f32 0.0, %v481
      %v483 = vpop.f32.mrf.mxu0
      %484 = vmatprep.mubr.bf16.mxu0 0
      %485 = vmatmul.mubr.bf16.gmra.mxu0 %v419
      %v486 = vpop.f32.mrf.mxu0
      %v487 = vadd.f32 0.0, %v486
      %v488 = vpop.f32.mrf.mxu0
      %v489 = vpop.f32.mrf.mxu0
      %v490 = vadd.f32 0.0, %v489
      %v491 = vpop.f32.mrf.mxu0
      %492 = vmatprep.mubr.bf16.mxu0 0
      %493 = vmatmul.mubr.bf16.gmra.mxu0 %v422
      %v494 = vpop.f32.mrf.mxu0
      %v495 = vadd.f32 0.0, %v494
      %v496 = vpop.f32.mrf.mxu0
      %v497 = vpop.f32.mrf.mxu0
      %v498 = vadd.f32 0.0, %v497
      %v499 = vpop.f32.mrf.mxu0
      %500 = vmatprep.mubr.bf16.mxu0 0
      %501 = vmatmul.mubr.bf16.gmra.mxu0 %v425
      %v502 = vpop.f32.mrf.mxu0
      %v503 = vadd.f32 0.0, %v502
      %v504 = vpop.f32.mrf.mxu0
      %v505 = vpop.f32.mrf.mxu0
      %v506 = vadd.f32 0.0, %v505
      %v507 = vpop.f32.mrf.mxu0
      %508 = vmatprep.mubr.bf16.mxu0 0
      %509 = vmatmul.mubr.bf16.gmra.mxu0 %v428
      %v510 = vpop.f32.mrf.mxu0
      %v511 = vadd.f32 0.0, %v510
      %v512 = vpop.f32.mrf.mxu0
      %v513 = vpop.f32.mrf.mxu0
      %v514 = vadd.f32 0.0, %v513
      %v515 = vpop.f32.mrf.mxu0
      %516 = vmatprep.mubr.bf16.mxu0 0
      %517 = vmatmul.mubr.bf16.gmra.mxu0 %v431
      %v518 = vpop.f32.mrf.mxu0
      %v519 = vadd.f32 0.0, %v518
      %v520 = vpop.f32.mrf.mxu0
      %v521 = vpop.f32.mrf.mxu0
      %v522 = vadd.f32 0.0, %v521
      %v523 = vpop.f32.mrf.mxu0
      %524 = vmatprep.mubr.bf16.mxu0 0
      %525 = vmatmul.mubr.bf16.gmra.mxu0 %v434
      %v526 = vpop.f32.mrf.mxu0
      %v527 = vadd.f32 0.0, %v526
      %v528 = vpop.f32.mrf.mxu0
      %v529 = vpop.f32.mrf.mxu0
      %v530 = vadd.f32 0.0, %v529
      %v531 = vpop.f32.mrf.mxu0
      %532 = vdwg.mxu0
      %v533 = vsel %vm411, %v471, 0.0
      %v534 = vsel %vm411, %v474, 0.0
      %v535 = vadd.f32 %v533, %v534
      %v536 = vsel %vm411, %v479, 0.0
      %v537 = vadd.f32 %v535, %v536
      %v538 = vsel %vm411, %v482, 0.0
      %v539 = vadd.f32 %v537, %v538
      %v540 = vsel %vm411, %v487, 0.0
      %v541 = vadd.f32 %v539, %v540
      %v542 = vsel %vm411, %v490, 0.0
      %v543 = vadd.f32 %v541, %v542
      %v544 = vsel %vm411, %v495, 0.0
      %v545 = vadd.f32 %v543, %v544
      %v546 = vsel %vm411, %v498, 0.0
      %v547 = vadd.f32 %v545, %v546
      %v548 = vsel %vm411, %v503, 0.0
      %v549 = vadd.f32 %v547, %v548
      %v550 = vsel %vm411, %v506, 0.0
      %v551 = vadd.f32 %v549, %v550
      %v552 = vsel %vm411, %v511, 0.0
      %v553 = vadd.f32 %v551, %v552
      %v554 = vsel %vm411, %v514, 0.0
      %v555 = vadd.f32 %v553, %v554
      %v556 = vsel %vm411, %v519, 0.0
      %v557 = vadd.f32 %v555, %v556
      %v558 = vsel %vm411, %v522, 0.0
      %v559 = vadd.f32 %v557, %v558
      %v560 = vsel %vm411, %v527, 0.0
      %v561 = vadd.f32 %v559, %v560
      %v562 = vsel %vm411, %v530, 0.0
      %v563 = vadd.f32 %v561, %v562
      %v564 = vrot.slane %v563, 4
      %v565 = vadd.f32 %v563, %v564
      %v566 = vrot.slane %v565, 2
      %v567 = vadd.f32 %v565, %v566
      %v568 = vrot.slane %v567, 1
      %v569 = vadd.f32 %v567, %v568
      %v570 = vmul.f32 %v569, 0.0078125
      %v571 = vmul.f32 %v471, %v471
      %v572 = vmul.f32 %v474, %v474
      %v573 = vmul.f32 %v479, %v479
      %v574 = vmul.f32 %v482, %v482
      %v575 = vmul.f32 %v487, %v487
      %v576 = vmul.f32 %v490, %v490
      %v577 = vmul.f32 %v495, %v495
      %v578 = vmul.f32 %v498, %v498
      %v579 = vmul.f32 %v503, %v503
      %v580 = vmul.f32 %v506, %v506
      %v581 = vmul.f32 %v511, %v511
      %v582 = vmul.f32 %v514, %v514
      %v583 = vmul.f32 %v519, %v519
      %v584 = vmul.f32 %v522, %v522
      %v585 = vmul.f32 %v527, %v527
      %v586 = vmul.f32 %v530, %v530
      %v587 = vsel %vm411, %v571, 0.0
      %v588 = vsel %vm411, %v572, 0.0
      %v589 = vadd.f32 %v587, %v588
      %v590 = vsel %vm411, %v573, 0.0
      %v591 = vadd.f32 %v589, %v590
      %v592 = vsel %vm411, %v574, 0.0
      %v593 = vadd.f32 %v591, %v592
      %v594 = vsel %vm411, %v575, 0.0
      %v595 = vadd.f32 %v593, %v594
      %v596 = vsel %vm411, %v576, 0.0
      %v597 = vadd.f32 %v595, %v596
      %v598 = vsel %vm411, %v577, 0.0
      %v599 = vadd.f32 %v597, %v598
      %v600 = vsel %vm411, %v578, 0.0
      %v601 = vadd.f32 %v599, %v600
      %v602 = vsel %vm411, %v579, 0.0
      %v603 = vadd.f32 %v601, %v602
      %v604 = vsel %vm411, %v580, 0.0
      %v605 = vadd.f32 %v603, %v604
      %v606 = vsel %vm411, %v581, 0.0
      %v607 = vadd.f32 %v605, %v606
      %v608 = vsel %vm411, %v582, 0.0
      %v609 = vadd.f32 %v607, %v608
      %v610 = vsel %vm411, %v583, 0.0
      %v611 = vadd.f32 %v609, %v610
      %v612 = vsel %vm411, %v584, 0.0
      %v613 = vadd.f32 %v611, %v612
      %v614 = vsel %vm411, %v585, 0.0
      %v615 = vadd.f32 %v613, %v614
      %v616 = vsel %vm411, %v586, 0.0
      %v617 = vadd.f32 %v615, %v616
      %v618 = vrot.slane %v617, 4
      %v619 = vadd.f32 %v617, %v618
      %v620 = vrot.slane %v619, 2
      %v621 = vadd.f32 %v619, %v620
      %v622 = vrot.slane %v621, 1
      %v623 = vadd.f32 %v621, %v622
      %v624 = vmul.f32 %v623, 0.0078125
      %v625 = vmul.f32 %v570, %v570
      %v626 = vsub.f32 %v624, %v625
      %v627 = vmax.f32 %v626, 0.0
      %v628 = vsub.f32 %v471, %v570
      %v629 = vsub.f32 %v474, %v570
      %v630 = vsub.f32 %v479, %v570
      %v631 = vsub.f32 %v482, %v570
      %v632 = vsub.f32 %v487, %v570
      %v633 = vsub.f32 %v490, %v570
      %v634 = vsub.f32 %v495, %v570
      %v635 = vsub.f32 %v498, %v570
      %v636 = vsub.f32 %v503, %v570
      %v637 = vsub.f32 %v506, %v570
      %v638 = vsub.f32 %v511, %v570
      %v639 = vsub.f32 %v514, %v570
      %v640 = vsub.f32 %v519, %v570
      %v641 = vsub.f32 %v522, %v570
      %v642 = vsub.f32 %v527, %v570
      %v643 = vsub.f32 %v530, %v570
      %v644 = vadd.f32 %v627, 1e-05
      %v645 = vrsqrt.pop %v644
      %v646 = vmul.f32 %v628, %v645
      %v647 = vmul.f32 %v629, %v645
      %v648 = vmul.f32 %v630, %v645
      %v649 = vmul.f32 %v631, %v645
      %v650 = vmul.f32 %v632, %v645
      %v651 = vmul.f32 %v633, %v645
      %v652 = vmul.f32 %v634, %v645
      %v653 = vmul.f32 %v635, %v645
      %v654 = vmul.f32 %v636, %v645
      %v655 = vmul.f32 %v637, %v645
      %v656 = vmul.f32 %v638, %v645
      %v657 = vmul.f32 %v639, %v645
      %v658 = vmul.f32 %v640, %v645
      %v659 = vmul.f32 %v641, %v645
      %v660 = vmul.f32 %v642, %v645
      %v661 = vmul.f32 %v643, %v645
      %v662 = vlaneseq
      %v663 = vshrl.u32 %v662, 7
      %v664 = vsub.s32 0, %v663
      %v665 = vrot.slane %v377, %v664
      %v666 = vmul.f32 %v646, %v665
      %v667 = vmul.f32 %v647, %v665
      %v668 = vmul.f32 %v648, %v665
      %v669 = vmul.f32 %v649, %v665
      %v670 = vmul.f32 %v650, %v665
      %v671 = vmul.f32 %v651, %v665
      %v672 = vmul.f32 %v652, %v665
      %v673 = vmul.f32 %v653, %v665
      %v674 = vmul.f32 %v654, %v665
      %v675 = vmul.f32 %v655, %v665
      %v676 = vmul.f32 %v656, %v665
      %v677 = vmul.f32 %v657, %v665
      %v678 = vmul.f32 %v658, %v665
      %v679 = vmul.f32 %v659, %v665
      %v680 = vmul.f32 %v660, %v665
      %v681 = vmul.f32 %v661, %v665
      %v682 = vlaneseq
      %v683 = vshrl.u32 %v682, 7
      %v684 = vsub.s32 0, %v683
      %v685 = vrot.slane %v378, %v684
      %v686 = vadd.f32 %v666, %v685
      %v687 = vadd.f32 %v667, %v685
      %v688 = vadd.f32 %v668, %v685
      %v689 = vadd.f32 %v669, %v685
      %v690 = vadd.f32 %v670, %v685
      %v691 = vadd.f32 %v671, %v685
      %v692 = vadd.f32 %v672, %v685
      %v693 = vadd.f32 %v673, %v685
      %v694 = vadd.f32 %v674, %v685
      %v695 = vadd.f32 %v675, %v685
      %v696 = vadd.f32 %v676, %v685
      %v697 = vadd.f32 %v677, %v685
      %v698 = vadd.f32 %v678, %v685
      %v699 = vadd.f32 %v679, %v685
      %v700 = vadd.f32 %v680, %v685
      %v701 = vadd.f32 %v681, %v685
      %v702 = vmax.f32 %v686, 0.0
      %v703 = vmax.f32 %v687, 0.0
      %v704 = vmax.f32 %v688, 0.0
      %v705 = vmax.f32 %v689, 0.0
      %v706 = vmax.f32 %v690, 0.0
      %v707 = vmax.f32 %v691, 0.0
      %v708 = vmax.f32 %v692, 0.0
      %v709 = vmax.f32 %v693, 0.0
      %v710 = vmax.f32 %v694, 0.0
      %v711 = vmax.f32 %v695, 0.0
      %v712 = vmax.f32 %v696, 0.0
      %v713 = vmax.f32 %v697, 0.0
      %v714 = vmax.f32 %v698, 0.0
      %v715 = vmax.f32 %v699, 0.0
      %v716 = vmax.f32 %v700, 0.0
      %v717 = vmax.f32 %v701, 0.0
      %v718 = vpack.c.bf16 %v703, %v702
      %v719 = vpack.c.bf16 %v705, %v704
      %v720 = vpack.c.bf16 %v707, %v706
      %v721 = vpack.c.bf16 %v709, %v708
      %v722 = vpack.c.bf16 %v711, %v710
      %v723 = vpack.c.bf16 %v713, %v712
      %v724 = vpack.c.bf16 %v715, %v714
      %v725 = vpack.c.bf16 %v717, %v716
      %v734 = vunpack.c.l.b16 %v353
      %v735 = vunpack.c.l.b16 %v354
      %v736 = vunpack.c.l.b16 %v355
      %v737 = vunpack.c.l.b16 %v356
      %v738 = vunpack.c.l.b16 %v357
      %v739 = vunpack.c.l.b16 %v358
      %v740 = vunpack.c.l.b16 %v359
      %v741 = vunpack.c.l.b16 %v360
      %v742 = vpack.c.b16 %v735, %v734
      %v743 = vpack.c.b16 %v737, %v736
      %v744 = vpack.c.b16 %v739, %v738
      %v745 = vpack.c.b16 %v741, %v740
      %v751 = vsel %vm411, %v718, 0
      %v754 = vsel %vm411, %v719, 0
      %v757 = vsel %vm411, %v720, 0
      %v760 = vsel %vm411, %v721, 0
      %v763 = vsel %vm411, %v722, 0
      %v766 = vsel %vm411, %v723, 0
      %v769 = vsel %vm411, %v724, 0
      %v772 = vsel %vm411, %v725, 0
      %774 = vmatprep.subr.bf16.mxu0 0
      %775 = vmatpush1.bf16.msra.mxu0 0
      %776 = vmatprep.subr.bf16.mxu0 0
      %777 = vmatpush1.bf16.msra.mxu0 0
      %778 = vmatprep.subr.bf16.mxu0 0
      %779 = vmatpush1.bf16.msra.mxu0 0
      %780 = vmatprep.subr.bf16.mxu0 0
      %781 = vmatpush1.bf16.msra.mxu0 0
      %782 = vmatprep.subr.bf16.mxu0 0
      %783 = vmatpush1.bf16.msra.mxu0 %v745
      %784 = vmatprep.subr.bf16.mxu0 0
      %785 = vmatpush1.bf16.msra.mxu0 %v744
      %786 = vmatprep.subr.bf16.mxu0 0
      %787 = vmatpush1.bf16.msra.mxu0 %v743
      %788 = vmatprep.subr.bf16.mxu0 0
      %789 = vmatpush1.bf16.msra.mxu0 %v742
      %790 = vmatprep.subr.bf16.mxu0 0
      %791 = vmatpush2.bf16.msra.mxu0 0
      %792 = vmatprep.subr.bf16.mxu0 0
      %793 = vmatpush2.bf16.msra.mxu0 0
      %794 = vmatprep.subr.bf16.mxu0 0
      %795 = vmatpush2.bf16.msra.mxu0 0
      %796 = vmatprep.subr.bf16.mxu0 0
      %797 = vmatpush2.bf16.msra.mxu0 0
      %798 = vmatprep.subr.bf16.mxu0 0
      %799 = vmatpush2.bf16.msra.mxu0 0
      %800 = vmatprep.subr.bf16.mxu0 0
      %801 = vmatpush2.bf16.msra.mxu0 0
      %802 = vmatprep.subr.bf16.mxu0 0
      %803 = vmatpush2.bf16.msra.mxu0 0
      %804 = vmatprep.subr.bf16.mxu0 0
      %805 = vmatpush2.bf16.msra.mxu0 0
      %806 = vmatprep.mubr.bf16.mxu0 0
      %807 = vmatmul.mubr.bf16.gmra.mxu0 %v751
      %v808 = vpop.f32.mrf.mxu0
      %v809 = vadd.f32 0.0, %v808
      %v810 = vpop.f32.mrf.mxu0
      %v811 = vpop.f32.mrf.mxu0
      %v812 = vadd.f32 0.0, %v811
      %v813 = vpop.f32.mrf.mxu0
      %814 = vmatprep.mubr.bf16.mxu0 0
      %815 = vmatmul.mubr.bf16.gmra.mxu0 %v754
      %v816 = vpop.f32.mrf.mxu0
      %v817 = vadd.f32 0.0, %v816
      %v818 = vpop.f32.mrf.mxu0
      %v819 = vpop.f32.mrf.mxu0
      %v820 = vadd.f32 0.0, %v819
      %v821 = vpop.f32.mrf.mxu0
      %822 = vmatprep.mubr.bf16.mxu0 0
      %823 = vmatmul.mubr.bf16.gmra.mxu0 %v757
      %v824 = vpop.f32.mrf.mxu0
      %v825 = vadd.f32 0.0, %v824
      %v826 = vpop.f32.mrf.mxu0
      %v827 = vpop.f32.mrf.mxu0
      %v828 = vadd.f32 0.0, %v827
      %v829 = vpop.f32.mrf.mxu0
      %830 = vmatprep.mubr.bf16.mxu0 0
      %831 = vmatmul.mubr.bf16.gmra.mxu0 %v760
      %v832 = vpop.f32.mrf.mxu0
      %v833 = vadd.f32 0.0, %v832
      %v834 = vpop.f32.mrf.mxu0
      %v835 = vpop.f32.mrf.mxu0
      %v836 = vadd.f32 0.0, %v835
      %v837 = vpop.f32.mrf.mxu0
      %838 = vmatprep.mubr.bf16.mxu0 0
      %839 = vmatmul.mubr.bf16.gmra.mxu0 %v763
      %v840 = vpop.f32.mrf.mxu0
      %v841 = vadd.f32 0.0, %v840
      %v842 = vpop.f32.mrf.mxu0
      %v843 = vpop.f32.mrf.mxu0
      %v844 = vadd.f32 0.0, %v843
      %v845 = vpop.f32.mrf.mxu0
      %846 = vmatprep.mubr.bf16.mxu0 0
      %847 = vmatmul.mubr.bf16.gmra.mxu0 %v766
      %v848 = vpop.f32.mrf.mxu0
      %v849 = vadd.f32 0.0, %v848
      %v850 = vpop.f32.mrf.mxu0
      %v851 = vpop.f32.mrf.mxu0
      %v852 = vadd.f32 0.0, %v851
      %v853 = vpop.f32.mrf.mxu0
      %854 = vmatprep.mubr.bf16.mxu0 0
      %855 = vmatmul.mubr.bf16.gmra.mxu0 %v769
      %v856 = vpop.f32.mrf.mxu0
      %v857 = vadd.f32 0.0, %v856
      %v858 = vpop.f32.mrf.mxu0
      %v859 = vpop.f32.mrf.mxu0
      %v860 = vadd.f32 0.0, %v859
      %v861 = vpop.f32.mrf.mxu0
      %862 = vmatprep.mubr.bf16.mxu0 0
      %863 = vmatmul.mubr.bf16.gmra.mxu0 %v772
      %v864 = vpop.f32.mrf.mxu0
      %v865 = vadd.f32 0.0, %v864
      %v866 = vpop.f32.mrf.mxu0
      %v867 = vpop.f32.mrf.mxu0
      %v868 = vadd.f32 0.0, %v867
      %v869 = vpop.f32.mrf.mxu0
      %870 = vdwg.mxu0
      %v871 = vsel %vm411, %v809, 0.0
      %v872 = vsel %vm411, %v812, 0.0
      %v873 = vadd.f32 %v871, %v872
      %v874 = vsel %vm411, %v817, 0.0
      %v875 = vadd.f32 %v873, %v874
      %v876 = vsel %vm411, %v820, 0.0
      %v877 = vadd.f32 %v875, %v876
      %v878 = vsel %vm411, %v825, 0.0
      %v879 = vadd.f32 %v877, %v878
      %v880 = vsel %vm411, %v828, 0.0
      %v881 = vadd.f32 %v879, %v880
      %v882 = vsel %vm411, %v833, 0.0
      %v883 = vadd.f32 %v881, %v882
      %v884 = vsel %vm411, %v836, 0.0
      %v885 = vadd.f32 %v883, %v884
      %v886 = vsel %vm411, %v841, 0.0
      %v887 = vadd.f32 %v885, %v886
      %v888 = vsel %vm411, %v844, 0.0
      %v889 = vadd.f32 %v887, %v888
      %v890 = vsel %vm411, %v849, 0.0
      %v891 = vadd.f32 %v889, %v890
      %v892 = vsel %vm411, %v852, 0.0
      %v893 = vadd.f32 %v891, %v892
      %v894 = vsel %vm411, %v857, 0.0
      %v895 = vadd.f32 %v893, %v894
      %v896 = vsel %vm411, %v860, 0.0
      %v897 = vadd.f32 %v895, %v896
      %v898 = vsel %vm411, %v865, 0.0
      %v899 = vadd.f32 %v897, %v898
      %v900 = vsel %vm411, %v868, 0.0
      %v901 = vadd.f32 %v899, %v900
      %v902 = vrot.slane %v901, 4
      %v903 = vadd.f32 %v901, %v902
      %v904 = vrot.slane %v903, 2
      %v905 = vadd.f32 %v903, %v904
      %v906 = vrot.slane %v905, 1
      %v907 = vadd.f32 %v905, %v906
      %v908 = vmul.f32 %v907, 0.0078125
      %v909 = vmul.f32 %v809, %v809
      %v910 = vmul.f32 %v812, %v812
      %v911 = vmul.f32 %v817, %v817
      %v912 = vmul.f32 %v820, %v820
      %v913 = vmul.f32 %v825, %v825
      %v914 = vmul.f32 %v828, %v828
      %v915 = vmul.f32 %v833, %v833
      %v916 = vmul.f32 %v836, %v836
      %v917 = vmul.f32 %v841, %v841
      %v918 = vmul.f32 %v844, %v844
      %v919 = vmul.f32 %v849, %v849
      %v920 = vmul.f32 %v852, %v852
      %v921 = vmul.f32 %v857, %v857
      %v922 = vmul.f32 %v860, %v860
      %v923 = vmul.f32 %v865, %v865
      %v924 = vmul.f32 %v868, %v868
      %v925 = vsel %vm411, %v909, 0.0
      %v926 = vsel %vm411, %v910, 0.0
      %v927 = vadd.f32 %v925, %v926
      %v928 = vsel %vm411, %v911, 0.0
      %v929 = vadd.f32 %v927, %v928
      %v930 = vsel %vm411, %v912, 0.0
      %v931 = vadd.f32 %v929, %v930
      %v932 = vsel %vm411, %v913, 0.0
      %v933 = vadd.f32 %v931, %v932
      %v934 = vsel %vm411, %v914, 0.0
      %v935 = vadd.f32 %v933, %v934
      %v936 = vsel %vm411, %v915, 0.0
      %v937 = vadd.f32 %v935, %v936
      %v938 = vsel %vm411, %v916, 0.0
      %v939 = vadd.f32 %v937, %v938
      %v940 = vsel %vm411, %v917, 0.0
      %v941 = vadd.f32 %v939, %v940
      %v942 = vsel %vm411, %v918, 0.0
      %v943 = vadd.f32 %v941, %v942
      %v944 = vsel %vm411, %v919, 0.0
      %v945 = vadd.f32 %v943, %v944
      %v946 = vsel %vm411, %v920, 0.0
      %v947 = vadd.f32 %v945, %v946
      %v948 = vsel %vm411, %v921, 0.0
      %v949 = vadd.f32 %v947, %v948
      %v950 = vsel %vm411, %v922, 0.0
      %v951 = vadd.f32 %v949, %v950
      %v952 = vsel %vm411, %v923, 0.0
      %v953 = vadd.f32 %v951, %v952
      %v954 = vsel %vm411, %v924, 0.0
      %v955 = vadd.f32 %v953, %v954
      %v956 = vrot.slane %v955, 4
      %v957 = vadd.f32 %v955, %v956
      %v958 = vrot.slane %v957, 2
      %v959 = vadd.f32 %v957, %v958
      %v960 = vrot.slane %v959, 1
      %v961 = vadd.f32 %v959, %v960
      %v962 = vmul.f32 %v961, 0.0078125
      %v963 = vmul.f32 %v908, %v908
      %v964 = vsub.f32 %v962, %v963
      %v965 = vmax.f32 %v964, 0.0
      %v966 = vsub.f32 %v809, %v908
      %v967 = vsub.f32 %v812, %v908
      %v968 = vsub.f32 %v817, %v908
      %v969 = vsub.f32 %v820, %v908
      %v970 = vsub.f32 %v825, %v908
      %v971 = vsub.f32 %v828, %v908
      %v972 = vsub.f32 %v833, %v908
      %v973 = vsub.f32 %v836, %v908
      %v974 = vsub.f32 %v841, %v908
      %v975 = vsub.f32 %v844, %v908
      %v976 = vsub.f32 %v849, %v908
      %v977 = vsub.f32 %v852, %v908
      %v978 = vsub.f32 %v857, %v908
      %v979 = vsub.f32 %v860, %v908
      %v980 = vsub.f32 %v865, %v908
      %v981 = vsub.f32 %v868, %v908
      %v982 = vadd.f32 %v965, 1e-05
      %v983 = vrsqrt.pop %v982
      %v984 = vmul.f32 %v966, %v983
      %v985 = vmul.f32 %v967, %v983
      %v986 = vmul.f32 %v968, %v983
      %v987 = vmul.f32 %v969, %v983
      %v988 = vmul.f32 %v970, %v983
      %v989 = vmul.f32 %v971, %v983
      %v990 = vmul.f32 %v972, %v983
      %v991 = vmul.f32 %v973, %v983
      %v992 = vmul.f32 %v974, %v983
      %v993 = vmul.f32 %v975, %v983
      %v994 = vmul.f32 %v976, %v983
      %v995 = vmul.f32 %v977, %v983
      %v996 = vmul.f32 %v978, %v983
      %v997 = vmul.f32 %v979, %v983
      %v998 = vmul.f32 %v980, %v983
      %v999 = vmul.f32 %v981, %v983
      %v1000 = vlaneseq
      %v1001 = vshrl.u32 %v1000, 7
      %v1002 = vsub.s32 1, %v1001
      %v1003 = vrot.slane %v377, %v1002
      %v1004 = vmul.f32 %v984, %v1003
      %v1005 = vmul.f32 %v985, %v1003
      %v1006 = vmul.f32 %v986, %v1003
      %v1007 = vmul.f32 %v987, %v1003
      %v1008 = vmul.f32 %v988, %v1003
      %v1009 = vmul.f32 %v989, %v1003
      %v1010 = vmul.f32 %v990, %v1003
      %v1011 = vmul.f32 %v991, %v1003
      %v1012 = vmul.f32 %v992, %v1003
      %v1013 = vmul.f32 %v993, %v1003
      %v1014 = vmul.f32 %v994, %v1003
      %v1015 = vmul.f32 %v995, %v1003
      %v1016 = vmul.f32 %v996, %v1003
      %v1017 = vmul.f32 %v997, %v1003
      %v1018 = vmul.f32 %v998, %v1003
      %v1019 = vmul.f32 %v999, %v1003
      %v1020 = vlaneseq
      %v1021 = vshrl.u32 %v1020, 7
      %v1022 = vsub.s32 1, %v1021
      %v1023 = vrot.slane %v378, %v1022
      %v1024 = vadd.f32 %v1004, %v1023
      %v1025 = vadd.f32 %v1005, %v1023
      %v1026 = vadd.f32 %v1006, %v1023
      %v1027 = vadd.f32 %v1007, %v1023
      %v1028 = vadd.f32 %v1008, %v1023
      %v1029 = vadd.f32 %v1009, %v1023
      %v1030 = vadd.f32 %v1010, %v1023
      %v1031 = vadd.f32 %v1011, %v1023
      %v1032 = vadd.f32 %v1012, %v1023
      %v1033 = vadd.f32 %v1013, %v1023
      %v1034 = vadd.f32 %v1014, %v1023
      %v1035 = vadd.f32 %v1015, %v1023
      %v1036 = vadd.f32 %v1016, %v1023
      %v1037 = vadd.f32 %v1017, %v1023
      %v1038 = vadd.f32 %v1018, %v1023
      %v1039 = vadd.f32 %v1019, %v1023
      %v1040 = vmax.f32 %v1024, 0.0
      %v1041 = vmax.f32 %v1025, 0.0
      %v1042 = vmax.f32 %v1026, 0.0
      %v1043 = vmax.f32 %v1027, 0.0
      %v1044 = vmax.f32 %v1028, 0.0
      %v1045 = vmax.f32 %v1029, 0.0
      %v1046 = vmax.f32 %v1030, 0.0
      %v1047 = vmax.f32 %v1031, 0.0
      %v1048 = vmax.f32 %v1032, 0.0
      %v1049 = vmax.f32 %v1033, 0.0
      %v1050 = vmax.f32 %v1034, 0.0
      %v1051 = vmax.f32 %v1035, 0.0
      %v1052 = vmax.f32 %v1036, 0.0
      %v1053 = vmax.f32 %v1037, 0.0
      %v1054 = vmax.f32 %v1038, 0.0
      %v1055 = vmax.f32 %v1039, 0.0
      %v1056 = vpack.c.bf16 %v1041, %v1040
      %v1057 = vpack.c.bf16 %v1043, %v1042
      %v1058 = vpack.c.bf16 %v1045, %v1044
      %v1059 = vpack.c.bf16 %v1047, %v1046
      %v1060 = vpack.c.bf16 %v1049, %v1048
      %v1061 = vpack.c.bf16 %v1051, %v1050
      %v1062 = vpack.c.bf16 %v1053, %v1052
      %v1063 = vpack.c.bf16 %v1055, %v1054
      %v1072 = vunpack.c.l.b16 %v361
      %v1073 = vunpack.c.l.b16 %v362
      %v1074 = vunpack.c.l.b16 %v363
      %v1075 = vunpack.c.l.b16 %v364
      %v1076 = vunpack.c.l.b16 %v365
      %v1077 = vunpack.c.l.b16 %v366
      %v1078 = vunpack.c.l.b16 %v367
      %v1079 = vunpack.c.l.b16 %v368
      %v1080 = vpack.c.b16 %v1073, %v1072
      %v1081 = vpack.c.b16 %v1075, %v1074
      %v1082 = vpack.c.b16 %v1077, %v1076
      %v1083 = vpack.c.b16 %v1079, %v1078
      %v1089 = vsel %vm411, %v1056, 0
      %v1092 = vsel %vm411, %v1057, 0
      %v1095 = vsel %vm411, %v1058, 0
      %v1098 = vsel %vm411, %v1059, 0
      %v1101 = vsel %vm411, %v1060, 0
      %v1104 = vsel %vm411, %v1061, 0
      %v1107 = vsel %vm411, %v1062, 0
      %v1110 = vsel %vm411, %v1063, 0
      %1112 = vmatprep.subr.bf16.mxu0 0
      %1113 = vmatpush1.bf16.msra.mxu0 0
      %1114 = vmatprep.subr.bf16.mxu0 0
      %1115 = vmatpush1.bf16.msra.mxu0 0
      %1116 = vmatprep.subr.bf16.mxu0 0
      %1117 = vmatpush1.bf16.msra.mxu0 0
      %1118 = vmatprep.subr.bf16.mxu0 0
      %1119 = vmatpush1.bf16.msra.mxu0 0
      %1120 = vmatprep.subr.bf16.mxu0 0
      %1121 = vmatpush1.bf16.msra.mxu0 %v1083
      %1122 = vmatprep.subr.bf16.mxu0 0
      %1123 = vmatpush1.bf16.msra.mxu0 %v1082
      %1124 = vmatprep.subr.bf16.mxu0 0
      %1125 = vmatpush1.bf16.msra.mxu0 %v1081
      %1126 = vmatprep.subr.bf16.mxu0 0
      %1127 = vmatpush1.bf16.msra.mxu0 %v1080
      %1128 = vmatprep.subr.bf16.mxu0 0
      %1129 = vmatpush2.bf16.msra.mxu0 0
      %1130 = vmatprep.subr.bf16.mxu0 0
      %1131 = vmatpush2.bf16.msra.mxu0 0
      %1132 = vmatprep.subr.bf16.mxu0 0
      %1133 = vmatpush2.bf16.msra.mxu0 0
      %1134 = vmatprep.subr.bf16.mxu0 0
      %1135 = vmatpush2.bf16.msra.mxu0 0
      %1136 = vmatprep.subr.bf16.mxu0 0
      %1137 = vmatpush2.bf16.msra.mxu0 0
      %1138 = vmatprep.subr.bf16.mxu0 0
      %1139 = vmatpush2.bf16.msra.mxu0 0
      %1140 = vmatprep.subr.bf16.mxu0 0
      %1141 = vmatpush2.bf16.msra.mxu0 0
      %1142 = vmatprep.subr.bf16.mxu0 0
      %1143 = vmatpush2.bf16.msra.mxu0 0
      %1144 = vmatprep.mubr.bf16.mxu0 0
      %1145 = vmatmul.mubr.bf16.gmra.mxu0 %v1089
      %v1146 = vpop.f32.mrf.mxu0
      %v1147 = vadd.f32 0.0, %v1146
      %v1148 = vpop.f32.mrf.mxu0
      %v1149 = vpop.f32.mrf.mxu0
      %v1150 = vadd.f32 0.0, %v1149
      %v1151 = vpop.f32.mrf.mxu0
      %1152 = vmatprep.mubr.bf16.mxu0 0
      %1153 = vmatmul.mubr.bf16.gmra.mxu0 %v1092
      %v1154 = vpop.f32.mrf.mxu0
      %v1155 = vadd.f32 0.0, %v1154
      %v1156 = vpop.f32.mrf.mxu0
      %v1157 = vpop.f32.mrf.mxu0
      %v1158 = vadd.f32 0.0, %v1157
      %v1159 = vpop.f32.mrf.mxu0
      %1160 = vmatprep.mubr.bf16.mxu0 0
      %1161 = vmatmul.mubr.bf16.gmra.mxu0 %v1095
      %v1162 = vpop.f32.mrf.mxu0
      %v1163 = vadd.f32 0.0, %v1162
      %v1164 = vpop.f32.mrf.mxu0
      %v1165 = vpop.f32.mrf.mxu0
      %v1166 = vadd.f32 0.0, %v1165
      %v1167 = vpop.f32.mrf.mxu0
      %1168 = vmatprep.mubr.bf16.mxu0 0
      %1169 = vmatmul.mubr.bf16.gmra.mxu0 %v1098
      %v1170 = vpop.f32.mrf.mxu0
      %v1171 = vadd.f32 0.0, %v1170
      %v1172 = vpop.f32.mrf.mxu0
      %v1173 = vpop.f32.mrf.mxu0
      %v1174 = vadd.f32 0.0, %v1173
      %v1175 = vpop.f32.mrf.mxu0
      %1176 = vmatprep.mubr.bf16.mxu0 0
      %1177 = vmatmul.mubr.bf16.gmra.mxu0 %v1101
      %v1178 = vpop.f32.mrf.mxu0
      %v1179 = vadd.f32 0.0, %v1178
      %v1180 = vpop.f32.mrf.mxu0
      %v1181 = vpop.f32.mrf.mxu0
      %v1182 = vadd.f32 0.0, %v1181
      %v1183 = vpop.f32.mrf.mxu0
      %1184 = vmatprep.mubr.bf16.mxu0 0
      %1185 = vmatmul.mubr.bf16.gmra.mxu0 %v1104
      %v1186 = vpop.f32.mrf.mxu0
      %v1187 = vadd.f32 0.0, %v1186
      %v1188 = vpop.f32.mrf.mxu0
      %v1189 = vpop.f32.mrf.mxu0
      %v1190 = vadd.f32 0.0, %v1189
      %v1191 = vpop.f32.mrf.mxu0
      %1192 = vmatprep.mubr.bf16.mxu0 0
      %1193 = vmatmul.mubr.bf16.gmra.mxu0 %v1107
      %v1194 = vpop.f32.mrf.mxu0
      %v1195 = vadd.f32 0.0, %v1194
      %v1196 = vpop.f32.mrf.mxu0
      %v1197 = vpop.f32.mrf.mxu0
      %v1198 = vadd.f32 0.0, %v1197
      %v1199 = vpop.f32.mrf.mxu0
      %1200 = vmatprep.mubr.bf16.mxu0 0
      %1201 = vmatmul.mubr.bf16.gmra.mxu0 %v1110
      %v1202 = vpop.f32.mrf.mxu0
      %v1203 = vadd.f32 0.0, %v1202
      %v1204 = vpop.f32.mrf.mxu0
      %v1205 = vpop.f32.mrf.mxu0
      %v1206 = vadd.f32 0.0, %v1205
      %v1207 = vpop.f32.mrf.mxu0
      %1208 = vdwg.mxu0
      %v1209 = vsel %vm411, %v1147, 0.0
      %v1210 = vsel %vm411, %v1150, 0.0
      %v1211 = vadd.f32 %v1209, %v1210
      %v1212 = vsel %vm411, %v1155, 0.0
      %v1213 = vadd.f32 %v1211, %v1212
      %v1214 = vsel %vm411, %v1158, 0.0
      %v1215 = vadd.f32 %v1213, %v1214
      %v1216 = vsel %vm411, %v1163, 0.0
      %v1217 = vadd.f32 %v1215, %v1216
      %v1218 = vsel %vm411, %v1166, 0.0
      %v1219 = vadd.f32 %v1217, %v1218
      %v1220 = vsel %vm411, %v1171, 0.0
      %v1221 = vadd.f32 %v1219, %v1220
      %v1222 = vsel %vm411, %v1174, 0.0
      %v1223 = vadd.f32 %v1221, %v1222
      %v1224 = vsel %vm411, %v1179, 0.0
      %v1225 = vadd.f32 %v1223, %v1224
      %v1226 = vsel %vm411, %v1182, 0.0
      %v1227 = vadd.f32 %v1225, %v1226
      %v1228 = vsel %vm411, %v1187, 0.0
      %v1229 = vadd.f32 %v1227, %v1228
      %v1230 = vsel %vm411, %v1190, 0.0
      %v1231 = vadd.f32 %v1229, %v1230
      %v1232 = vsel %vm411, %v1195, 0.0
      %v1233 = vadd.f32 %v1231, %v1232
      %v1234 = vsel %vm411, %v1198, 0.0
      %v1235 = vadd.f32 %v1233, %v1234
      %v1236 = vsel %vm411, %v1203, 0.0
      %v1237 = vadd.f32 %v1235, %v1236
      %v1238 = vsel %vm411, %v1206, 0.0
      %v1239 = vadd.f32 %v1237, %v1238
      %v1240 = vrot.slane %v1239, 4
      %v1241 = vadd.f32 %v1239, %v1240
      %v1242 = vrot.slane %v1241, 2
      %v1243 = vadd.f32 %v1241, %v1242
      %v1244 = vrot.slane %v1243, 1
      %v1245 = vadd.f32 %v1243, %v1244
      %v1246 = vmul.f32 %v1245, 0.0078125
      %v1247 = vmul.f32 %v1147, %v1147
      %v1248 = vmul.f32 %v1150, %v1150
      %v1249 = vmul.f32 %v1155, %v1155
      %v1250 = vmul.f32 %v1158, %v1158
      %v1251 = vmul.f32 %v1163, %v1163
      %v1252 = vmul.f32 %v1166, %v1166
      %v1253 = vmul.f32 %v1171, %v1171
      %v1254 = vmul.f32 %v1174, %v1174
      %v1255 = vmul.f32 %v1179, %v1179
      %v1256 = vmul.f32 %v1182, %v1182
      %v1257 = vmul.f32 %v1187, %v1187
      %v1258 = vmul.f32 %v1190, %v1190
      %v1259 = vmul.f32 %v1195, %v1195
      %v1260 = vmul.f32 %v1198, %v1198
      %v1261 = vmul.f32 %v1203, %v1203
      %v1262 = vmul.f32 %v1206, %v1206
      %v1263 = vsel %vm411, %v1247, 0.0
      %v1264 = vsel %vm411, %v1248, 0.0
      %v1265 = vadd.f32 %v1263, %v1264
      %v1266 = vsel %vm411, %v1249, 0.0
      %v1267 = vadd.f32 %v1265, %v1266
      %v1268 = vsel %vm411, %v1250, 0.0
      %v1269 = vadd.f32 %v1267, %v1268
      %v1270 = vsel %vm411, %v1251, 0.0
      %v1271 = vadd.f32 %v1269, %v1270
      %v1272 = vsel %vm411, %v1252, 0.0
      %v1273 = vadd.f32 %v1271, %v1272
      %v1274 = vsel %vm411, %v1253, 0.0
      %v1275 = vadd.f32 %v1273, %v1274
      %v1276 = vsel %vm411, %v1254, 0.0
      %v1277 = vadd.f32 %v1275, %v1276
      %v1278 = vsel %vm411, %v1255, 0.0
      %v1279 = vadd.f32 %v1277, %v1278
      %v1280 = vsel %vm411, %v1256, 0.0
      %v1281 = vadd.f32 %v1279, %v1280
      %v1282 = vsel %vm411, %v1257, 0.0
      %v1283 = vadd.f32 %v1281, %v1282
      %v1284 = vsel %vm411, %v1258, 0.0
      %v1285 = vadd.f32 %v1283, %v1284
      %v1286 = vsel %vm411, %v1259, 0.0
      %v1287 = vadd.f32 %v1285, %v1286
      %v1288 = vsel %vm411, %v1260, 0.0
      %v1289 = vadd.f32 %v1287, %v1288
      %v1290 = vsel %vm411, %v1261, 0.0
      %v1291 = vadd.f32 %v1289, %v1290
      %v1292 = vsel %vm411, %v1262, 0.0
      %v1293 = vadd.f32 %v1291, %v1292
      %v1294 = vrot.slane %v1293, 4
      %v1295 = vadd.f32 %v1293, %v1294
      %v1296 = vrot.slane %v1295, 2
      %v1297 = vadd.f32 %v1295, %v1296
      %v1298 = vrot.slane %v1297, 1
      %v1299 = vadd.f32 %v1297, %v1298
      %v1300 = vmul.f32 %v1299, 0.0078125
      %v1301 = vmul.f32 %v1246, %v1246
      %v1302 = vsub.f32 %v1300, %v1301
      %v1303 = vmax.f32 %v1302, 0.0
      %v1304 = vsub.f32 %v1147, %v1246
      %v1305 = vsub.f32 %v1150, %v1246
      %v1306 = vsub.f32 %v1155, %v1246
      %v1307 = vsub.f32 %v1158, %v1246
      %v1308 = vsub.f32 %v1163, %v1246
      %v1309 = vsub.f32 %v1166, %v1246
      %v1310 = vsub.f32 %v1171, %v1246
      %v1311 = vsub.f32 %v1174, %v1246
      %v1312 = vsub.f32 %v1179, %v1246
      %v1313 = vsub.f32 %v1182, %v1246
      %v1314 = vsub.f32 %v1187, %v1246
      %v1315 = vsub.f32 %v1190, %v1246
      %v1316 = vsub.f32 %v1195, %v1246
      %v1317 = vsub.f32 %v1198, %v1246
      %v1318 = vsub.f32 %v1203, %v1246
      %v1319 = vsub.f32 %v1206, %v1246
      %v1320 = vadd.f32 %v1303, 1e-05
      %v1321 = vrsqrt.pop %v1320
      %v1322 = vmul.f32 %v1304, %v1321
      %v1323 = vmul.f32 %v1305, %v1321
      %v1324 = vmul.f32 %v1306, %v1321
      %v1325 = vmul.f32 %v1307, %v1321
      %v1326 = vmul.f32 %v1308, %v1321
      %v1327 = vmul.f32 %v1309, %v1321
      %v1328 = vmul.f32 %v1310, %v1321
      %v1329 = vmul.f32 %v1311, %v1321
      %v1330 = vmul.f32 %v1312, %v1321
      %v1331 = vmul.f32 %v1313, %v1321
      %v1332 = vmul.f32 %v1314, %v1321
      %v1333 = vmul.f32 %v1315, %v1321
      %v1334 = vmul.f32 %v1316, %v1321
      %v1335 = vmul.f32 %v1317, %v1321
      %v1336 = vmul.f32 %v1318, %v1321
      %v1337 = vmul.f32 %v1319, %v1321
      %v1338 = vlaneseq
      %v1339 = vshrl.u32 %v1338, 7
      %v1340 = vsub.s32 2, %v1339
      %v1341 = vrot.slane %v377, %v1340
      %v1342 = vmul.f32 %v1322, %v1341
      %v1343 = vmul.f32 %v1323, %v1341
      %v1344 = vmul.f32 %v1324, %v1341
      %v1345 = vmul.f32 %v1325, %v1341
      %v1346 = vmul.f32 %v1326, %v1341
      %v1347 = vmul.f32 %v1327, %v1341
      %v1348 = vmul.f32 %v1328, %v1341
      %v1349 = vmul.f32 %v1329, %v1341
      %v1350 = vmul.f32 %v1330, %v1341
      %v1351 = vmul.f32 %v1331, %v1341
      %v1352 = vmul.f32 %v1332, %v1341
      %v1353 = vmul.f32 %v1333, %v1341
      %v1354 = vmul.f32 %v1334, %v1341
      %v1355 = vmul.f32 %v1335, %v1341
      %v1356 = vmul.f32 %v1336, %v1341
      %v1357 = vmul.f32 %v1337, %v1341
      %v1358 = vlaneseq
      %v1359 = vshrl.u32 %v1358, 7
      %v1360 = vsub.s32 2, %v1359
      %v1361 = vrot.slane %v378, %v1360
      %v1362 = vadd.f32 %v1342, %v1361
      %v1363 = vadd.f32 %v1343, %v1361
      %v1364 = vadd.f32 %v1344, %v1361
      %v1365 = vadd.f32 %v1345, %v1361
      %v1366 = vadd.f32 %v1346, %v1361
      %v1367 = vadd.f32 %v1347, %v1361
      %v1368 = vadd.f32 %v1348, %v1361
      %v1369 = vadd.f32 %v1349, %v1361
      %v1370 = vadd.f32 %v1350, %v1361
      %v1371 = vadd.f32 %v1351, %v1361
      %v1372 = vadd.f32 %v1352, %v1361
      %v1373 = vadd.f32 %v1353, %v1361
      %v1374 = vadd.f32 %v1354, %v1361
      %v1375 = vadd.f32 %v1355, %v1361
      %v1376 = vadd.f32 %v1356, %v1361
      %v1377 = vadd.f32 %v1357, %v1361
      %v1378 = vmax.f32 %v1362, 0.0
      %v1379 = vmax.f32 %v1363, 0.0
      %v1380 = vmax.f32 %v1364, 0.0
      %v1381 = vmax.f32 %v1365, 0.0
      %v1382 = vmax.f32 %v1366, 0.0
      %v1383 = vmax.f32 %v1367, 0.0
      %v1384 = vmax.f32 %v1368, 0.0
      %v1385 = vmax.f32 %v1369, 0.0
      %v1386 = vmax.f32 %v1370, 0.0
      %v1387 = vmax.f32 %v1371, 0.0
      %v1388 = vmax.f32 %v1372, 0.0
      %v1389 = vmax.f32 %v1373, 0.0
      %v1390 = vmax.f32 %v1374, 0.0
      %v1391 = vmax.f32 %v1375, 0.0
      %v1392 = vmax.f32 %v1376, 0.0
      %v1393 = vmax.f32 %v1377, 0.0
      %v1394 = vpack.c.bf16 %v1379, %v1378
      %v1395 = vpack.c.bf16 %v1381, %v1380
      %v1396 = vpack.c.bf16 %v1383, %v1382
      %v1397 = vpack.c.bf16 %v1385, %v1384
      %v1398 = vpack.c.bf16 %v1387, %v1386
      %v1399 = vpack.c.bf16 %v1389, %v1388
      %v1400 = vpack.c.bf16 %v1391, %v1390
      %v1401 = vpack.c.bf16 %v1393, %v1392
      %v1410 = vunpack.c.l.b16 %v369
      %v1411 = vunpack.c.l.b16 %v370
      %v1412 = vunpack.c.l.b16 %v371
      %v1413 = vunpack.c.l.b16 %v372
      %v1414 = vunpack.c.l.b16 %v373
      %v1415 = vunpack.c.l.b16 %v374
      %v1416 = vunpack.c.l.b16 %v375
      %v1417 = vunpack.c.l.b16 %v376
      %v1418 = vpack.c.b16 %v1411, %v1410
      %v1419 = vpack.c.b16 %v1413, %v1412
      %v1420 = vpack.c.b16 %v1415, %v1414
      %v1421 = vpack.c.b16 %v1417, %v1416
      %v1427 = vsel %vm411, %v1394, 0
      %v1430 = vsel %vm411, %v1395, 0
      %v1433 = vsel %vm411, %v1396, 0
      %v1436 = vsel %vm411, %v1397, 0
      %v1439 = vsel %vm411, %v1398, 0
      %v1442 = vsel %vm411, %v1399, 0
      %v1445 = vsel %vm411, %v1400, 0
      %v1448 = vsel %vm411, %v1401, 0
      %1450 = vmatprep.subr.bf16.mxu0 0
      %1451 = vmatpush1.bf16.msra.mxu0 0
      %1452 = vmatprep.subr.bf16.mxu0 0
      %1453 = vmatpush1.bf16.msra.mxu0 0
      %1454 = vmatprep.subr.bf16.mxu0 0
      %1455 = vmatpush1.bf16.msra.mxu0 0
      %1456 = vmatprep.subr.bf16.mxu0 0
      %1457 = vmatpush1.bf16.msra.mxu0 0
      %1458 = vmatprep.subr.bf16.mxu0 0
      %1459 = vmatpush1.bf16.msra.mxu0 %v1421
      %1460 = vmatprep.subr.bf16.mxu0 0
      %1461 = vmatpush1.bf16.msra.mxu0 %v1420
      %1462 = vmatprep.subr.bf16.mxu0 0
      %1463 = vmatpush1.bf16.msra.mxu0 %v1419
      %1464 = vmatprep.subr.bf16.mxu0 0
      %1465 = vmatpush1.bf16.msra.mxu0 %v1418
      %1466 = vmatprep.subr.bf16.mxu0 0
      %1467 = vmatpush2.bf16.msra.mxu0 0
      %1468 = vmatprep.subr.bf16.mxu0 0
      %1469 = vmatpush2.bf16.msra.mxu0 0
      %1470 = vmatprep.subr.bf16.mxu0 0
      %1471 = vmatpush2.bf16.msra.mxu0 0
      %1472 = vmatprep.subr.bf16.mxu0 0
      %1473 = vmatpush2.bf16.msra.mxu0 0
      %1474 = vmatprep.subr.bf16.mxu0 0
      %1475 = vmatpush2.bf16.msra.mxu0 0
      %1476 = vmatprep.subr.bf16.mxu0 0
      %1477 = vmatpush2.bf16.msra.mxu0 0
      %1478 = vmatprep.subr.bf16.mxu0 0
      %1479 = vmatpush2.bf16.msra.mxu0 0
      %1480 = vmatprep.subr.bf16.mxu0 0
      %1481 = vmatpush2.bf16.msra.mxu0 0
      %1482 = vmatprep.mubr.bf16.mxu0 0
      %1483 = vmatmul.mubr.bf16.gmra.mxu0 %v1427
      %v1484 = vpop.f32.mrf.mxu0
      %v1485 = vadd.f32 0.0, %v1484
      %v1486 = vpop.f32.mrf.mxu0
      %v1487 = vpop.f32.mrf.mxu0
      %v1488 = vadd.f32 0.0, %v1487
      %v1489 = vpop.f32.mrf.mxu0
      %1490 = vmatprep.mubr.bf16.mxu0 0
      %1491 = vmatmul.mubr.bf16.gmra.mxu0 %v1430
      %v1492 = vpop.f32.mrf.mxu0
      %v1493 = vadd.f32 0.0, %v1492
      %v1494 = vpop.f32.mrf.mxu0
      %v1495 = vpop.f32.mrf.mxu0
      %v1496 = vadd.f32 0.0, %v1495
      %v1497 = vpop.f32.mrf.mxu0
      %1498 = vmatprep.mubr.bf16.mxu0 0
      %1499 = vmatmul.mubr.bf16.gmra.mxu0 %v1433
      %v1500 = vpop.f32.mrf.mxu0
      %v1501 = vadd.f32 0.0, %v1500
      %v1502 = vpop.f32.mrf.mxu0
      %v1503 = vpop.f32.mrf.mxu0
      %v1504 = vadd.f32 0.0, %v1503
      %v1505 = vpop.f32.mrf.mxu0
      %1506 = vmatprep.mubr.bf16.mxu0 0
      %1507 = vmatmul.mubr.bf16.gmra.mxu0 %v1436
      %v1508 = vpop.f32.mrf.mxu0
      %v1509 = vadd.f32 0.0, %v1508
      %v1510 = vpop.f32.mrf.mxu0
      %v1511 = vpop.f32.mrf.mxu0
      %v1512 = vadd.f32 0.0, %v1511
      %v1513 = vpop.f32.mrf.mxu0
      %1514 = vmatprep.mubr.bf16.mxu0 0
      %1515 = vmatmul.mubr.bf16.gmra.mxu0 %v1439
      %v1516 = vpop.f32.mrf.mxu0
      %v1517 = vadd.f32 0.0, %v1516
      %v1518 = vpop.f32.mrf.mxu0
      %v1519 = vpop.f32.mrf.mxu0
      %v1520 = vadd.f32 0.0, %v1519
      %v1521 = vpop.f32.mrf.mxu0
      %1522 = vmatprep.mubr.bf16.mxu0 0
      %1523 = vmatmul.mubr.bf16.gmra.mxu0 %v1442
      %v1524 = vpop.f32.mrf.mxu0
      %v1525 = vadd.f32 0.0, %v1524
      %v1526 = vpop.f32.mrf.mxu0
      %v1527 = vpop.f32.mrf.mxu0
      %v1528 = vadd.f32 0.0, %v1527
      %v1529 = vpop.f32.mrf.mxu0
      %1530 = vmatprep.mubr.bf16.mxu0 0
      %1531 = vmatmul.mubr.bf16.gmra.mxu0 %v1445
      %v1532 = vpop.f32.mrf.mxu0
      %v1533 = vadd.f32 0.0, %v1532
      %v1534 = vpop.f32.mrf.mxu0
      %v1535 = vpop.f32.mrf.mxu0
      %v1536 = vadd.f32 0.0, %v1535
      %v1537 = vpop.f32.mrf.mxu0
      %1538 = vmatprep.mubr.bf16.mxu0 0
      %1539 = vmatmul.mubr.bf16.gmra.mxu0 %v1448
      %v1540 = vpop.f32.mrf.mxu0
      %v1541 = vadd.f32 0.0, %v1540
      %v1542 = vpop.f32.mrf.mxu0
      %v1543 = vpop.f32.mrf.mxu0
      %v1544 = vadd.f32 0.0, %v1543
      %v1545 = vpop.f32.mrf.mxu0
      %1546 = vdwg.mxu0
      %v1547 = vsel %vm411, %v1485, 0.0
      %v1548 = vsel %vm411, %v1488, 0.0
      %v1549 = vadd.f32 %v1547, %v1548
      %v1550 = vsel %vm411, %v1493, 0.0
      %v1551 = vadd.f32 %v1549, %v1550
      %v1552 = vsel %vm411, %v1496, 0.0
      %v1553 = vadd.f32 %v1551, %v1552
      %v1554 = vsel %vm411, %v1501, 0.0
      %v1555 = vadd.f32 %v1553, %v1554
      %v1556 = vsel %vm411, %v1504, 0.0
      %v1557 = vadd.f32 %v1555, %v1556
      %v1558 = vsel %vm411, %v1509, 0.0
      %v1559 = vadd.f32 %v1557, %v1558
      %v1560 = vsel %vm411, %v1512, 0.0
      %v1561 = vadd.f32 %v1559, %v1560
      %v1562 = vsel %vm411, %v1517, 0.0
      %v1563 = vadd.f32 %v1561, %v1562
      %v1564 = vsel %vm411, %v1520, 0.0
      %v1565 = vadd.f32 %v1563, %v1564
      %v1566 = vsel %vm411, %v1525, 0.0
      %v1567 = vadd.f32 %v1565, %v1566
      %v1568 = vsel %vm411, %v1528, 0.0
      %v1569 = vadd.f32 %v1567, %v1568
      %v1570 = vsel %vm411, %v1533, 0.0
      %v1571 = vadd.f32 %v1569, %v1570
      %v1572 = vsel %vm411, %v1536, 0.0
      %v1573 = vadd.f32 %v1571, %v1572
      %v1574 = vsel %vm411, %v1541, 0.0
      %v1575 = vadd.f32 %v1573, %v1574
      %v1576 = vsel %vm411, %v1544, 0.0
      %v1577 = vadd.f32 %v1575, %v1576
      %v1578 = vrot.slane %v1577, 4
      %v1579 = vadd.f32 %v1577, %v1578
      %v1580 = vrot.slane %v1579, 2
      %v1581 = vadd.f32 %v1579, %v1580
      %v1582 = vrot.slane %v1581, 1
      %v1583 = vadd.f32 %v1581, %v1582
      %v1584 = vmul.f32 %v1583, 0.0078125
      %v1585 = vmul.f32 %v1485, %v1485
      %v1586 = vmul.f32 %v1488, %v1488
      %v1587 = vmul.f32 %v1493, %v1493
      %v1588 = vmul.f32 %v1496, %v1496
      %v1589 = vmul.f32 %v1501, %v1501
      %v1590 = vmul.f32 %v1504, %v1504
      %v1591 = vmul.f32 %v1509, %v1509
      %v1592 = vmul.f32 %v1512, %v1512
      %v1593 = vmul.f32 %v1517, %v1517
      %v1594 = vmul.f32 %v1520, %v1520
      %v1595 = vmul.f32 %v1525, %v1525
      %v1596 = vmul.f32 %v1528, %v1528
      %v1597 = vmul.f32 %v1533, %v1533
      %v1598 = vmul.f32 %v1536, %v1536
      %v1599 = vmul.f32 %v1541, %v1541
      %v1600 = vmul.f32 %v1544, %v1544
      %v1601 = vsel %vm411, %v1585, 0.0
      %v1602 = vsel %vm411, %v1586, 0.0
      %v1603 = vadd.f32 %v1601, %v1602
      %v1604 = vsel %vm411, %v1587, 0.0
      %v1605 = vadd.f32 %v1603, %v1604
      %v1606 = vsel %vm411, %v1588, 0.0
      %v1607 = vadd.f32 %v1605, %v1606
      %v1608 = vsel %vm411, %v1589, 0.0
      %v1609 = vadd.f32 %v1607, %v1608
      %v1610 = vsel %vm411, %v1590, 0.0
      %v1611 = vadd.f32 %v1609, %v1610
      %v1612 = vsel %vm411, %v1591, 0.0
      %v1613 = vadd.f32 %v1611, %v1612
      %v1614 = vsel %vm411, %v1592, 0.0
      %v1615 = vadd.f32 %v1613, %v1614
      %v1616 = vsel %vm411, %v1593, 0.0
      %v1617 = vadd.f32 %v1615, %v1616
      %v1618 = vsel %vm411, %v1594, 0.0
      %v1619 = vadd.f32 %v1617, %v1618
      %v1620 = vsel %vm411, %v1595, 0.0
      %v1621 = vadd.f32 %v1619, %v1620
      %v1622 = vsel %vm411, %v1596, 0.0
      %v1623 = vadd.f32 %v1621, %v1622
      %v1624 = vsel %vm411, %v1597, 0.0
      %v1625 = vadd.f32 %v1623, %v1624
      %v1626 = vsel %vm411, %v1598, 0.0
      %v1627 = vadd.f32 %v1625, %v1626
      %v1628 = vsel %vm411, %v1599, 0.0
      %v1629 = vadd.f32 %v1627, %v1628
      %v1630 = vsel %vm411, %v1600, 0.0
      %v1631 = vadd.f32 %v1629, %v1630
      %v1632 = vrot.slane %v1631, 4
      %v1633 = vadd.f32 %v1631, %v1632
      %v1634 = vrot.slane %v1633, 2
      %v1635 = vadd.f32 %v1633, %v1634
      %v1636 = vrot.slane %v1635, 1
      %v1637 = vadd.f32 %v1635, %v1636
      %v1638 = vmul.f32 %v1637, 0.0078125
      %v1639 = vmul.f32 %v1584, %v1584
      %v1640 = vsub.f32 %v1638, %v1639
      %v1641 = vmax.f32 %v1640, 0.0
      %v1642 = vsub.f32 %v1485, %v1584
      %v1643 = vsub.f32 %v1488, %v1584
      %v1644 = vsub.f32 %v1493, %v1584
      %v1645 = vsub.f32 %v1496, %v1584
      %v1646 = vsub.f32 %v1501, %v1584
      %v1647 = vsub.f32 %v1504, %v1584
      %v1648 = vsub.f32 %v1509, %v1584
      %v1649 = vsub.f32 %v1512, %v1584
      %v1650 = vsub.f32 %v1517, %v1584
      %v1651 = vsub.f32 %v1520, %v1584
      %v1652 = vsub.f32 %v1525, %v1584
      %v1653 = vsub.f32 %v1528, %v1584
      %v1654 = vsub.f32 %v1533, %v1584
      %v1655 = vsub.f32 %v1536, %v1584
      %v1656 = vsub.f32 %v1541, %v1584
      %v1657 = vsub.f32 %v1544, %v1584
      %v1658 = vadd.f32 %v1641, 1e-05
      %v1659 = vrsqrt.pop %v1658
      %v1660 = vmul.f32 %v1642, %v1659
      %v1661 = vmul.f32 %v1643, %v1659
      %v1662 = vmul.f32 %v1644, %v1659
      %v1663 = vmul.f32 %v1645, %v1659
      %v1664 = vmul.f32 %v1646, %v1659
      %v1665 = vmul.f32 %v1647, %v1659
      %v1666 = vmul.f32 %v1648, %v1659
      %v1667 = vmul.f32 %v1649, %v1659
      %v1668 = vmul.f32 %v1650, %v1659
      %v1669 = vmul.f32 %v1651, %v1659
      %v1670 = vmul.f32 %v1652, %v1659
      %v1671 = vmul.f32 %v1653, %v1659
      %v1672 = vmul.f32 %v1654, %v1659
      %v1673 = vmul.f32 %v1655, %v1659
      %v1674 = vmul.f32 %v1656, %v1659
      %v1675 = vmul.f32 %v1657, %v1659
      %v1676 = vlaneseq
      %v1677 = vshrl.u32 %v1676, 7
      %v1678 = vsub.s32 3, %v1677
      %v1679 = vrot.slane %v377, %v1678
      %v1680 = vmul.f32 %v1660, %v1679
      %v1681 = vmul.f32 %v1661, %v1679
      %v1682 = vmul.f32 %v1662, %v1679
      %v1683 = vmul.f32 %v1663, %v1679
      %v1684 = vmul.f32 %v1664, %v1679
      %v1685 = vmul.f32 %v1665, %v1679
      %v1686 = vmul.f32 %v1666, %v1679
      %v1687 = vmul.f32 %v1667, %v1679
      %v1688 = vmul.f32 %v1668, %v1679
      %v1689 = vmul.f32 %v1669, %v1679
      %v1690 = vmul.f32 %v1670, %v1679
      %v1691 = vmul.f32 %v1671, %v1679
      %v1692 = vmul.f32 %v1672, %v1679
      %v1693 = vmul.f32 %v1673, %v1679
      %v1694 = vmul.f32 %v1674, %v1679
      %v1695 = vmul.f32 %v1675, %v1679
      %v1696 = vlaneseq
      %v1697 = vshrl.u32 %v1696, 7
      %v1698 = vsub.s32 3, %v1697
      %v1699 = vrot.slane %v378, %v1698
      %v1700 = vadd.f32 %v1680, %v1699
      %v1701 = vadd.f32 %v1681, %v1699
      %v1702 = vadd.f32 %v1682, %v1699
      %v1703 = vadd.f32 %v1683, %v1699
      %v1704 = vadd.f32 %v1684, %v1699
      %v1705 = vadd.f32 %v1685, %v1699
      %v1706 = vadd.f32 %v1686, %v1699
      %v1707 = vadd.f32 %v1687, %v1699
      %v1708 = vadd.f32 %v1688, %v1699
      %v1709 = vadd.f32 %v1689, %v1699
      %v1710 = vadd.f32 %v1690, %v1699
      %v1711 = vadd.f32 %v1691, %v1699
      %v1712 = vadd.f32 %v1692, %v1699
      %v1713 = vadd.f32 %v1693, %v1699
      %v1714 = vadd.f32 %v1694, %v1699
      %v1715 = vadd.f32 %v1695, %v1699
      %v1716 = vmax.f32 %v1700, 0.0
      %v1717 = vmax.f32 %v1701, 0.0
      %v1718 = vmax.f32 %v1702, 0.0
      %v1719 = vmax.f32 %v1703, 0.0
      %v1720 = vmax.f32 %v1704, 0.0
      %v1721 = vmax.f32 %v1705, 0.0
      %v1722 = vmax.f32 %v1706, 0.0
      %v1723 = vmax.f32 %v1707, 0.0
      %v1724 = vmax.f32 %v1708, 0.0
      %v1725 = vmax.f32 %v1709, 0.0
      %v1726 = vmax.f32 %v1710, 0.0
      %v1727 = vmax.f32 %v1711, 0.0
      %v1728 = vmax.f32 %v1712, 0.0
      %v1729 = vmax.f32 %v1713, 0.0
      %v1730 = vmax.f32 %v1714, 0.0
      %v1731 = vmax.f32 %v1715, 0.0
      %v1732 = vld [vmem:[%s1] sm:$0x1]
      %v1733 = vld [vmem:[%s290] sm:$0xf]
      %v1734 = vld [vmem:[%s290 + $0x4] sm:$0xf]
      %v1735 = vld [vmem:[%s290 + $0x8] sm:$0xf]
      %v1736 = vld [vmem:[%s290 + $0xc] sm:$0xf]
      %v1737 = vld [vmem:[%s290 + $0x10] sm:$0xf]
      %v1738 = vld [vmem:[%s290 + $0x14] sm:$0xf]
      %v1739 = vld [vmem:[%s290 + $0x18] sm:$0xf]
      %v1740 = vld [vmem:[%s290 + $0x1c] sm:$0xf]
      %v1749 = vunpack.c.l.b16 %v1733
      %v1750 = vunpack.c.l.b16 %v1734
      %v1751 = vunpack.c.l.b16 %v1735
      %v1752 = vunpack.c.l.b16 %v1736
      %v1753 = vunpack.c.l.b16 %v1737
      %v1754 = vunpack.c.l.b16 %v1738
      %v1755 = vunpack.c.l.b16 %v1739
      %v1756 = vunpack.c.l.b16 %v1740
      %v1757 = vpack.c.b16 %v1750, %v1749
      %v1758 = vpack.c.b16 %v1752, %v1751
      %v1759 = vpack.c.b16 %v1754, %v1753
      %v1760 = vpack.c.b16 %v1756, %v1755
      %v1766 = vsel %vm411, %v1732, 0
      %1768 = vmatprep.subr.bf16.mxu0 0
      %1769 = vmatpush1.bf16.msra.mxu0 0
      %1770 = vmatprep.subr.bf16.mxu0 0
      %1771 = vmatpush1.bf16.msra.mxu0 0
      %1772 = vmatprep.subr.bf16.mxu0 0
      %1773 = vmatpush1.bf16.msra.mxu0 0
      %1774 = vmatprep.subr.bf16.mxu0 0
      %1775 = vmatpush1.bf16.msra.mxu0 0
      %1776 = vmatprep.subr.bf16.mxu0 0
      %1777 = vmatpush1.bf16.msra.mxu0 %v1760
      %1778 = vmatprep.subr.bf16.mxu0 0
      %1779 = vmatpush1.bf16.msra.mxu0 %v1759
      %1780 = vmatprep.subr.bf16.mxu0 0
      %1781 = vmatpush1.bf16.msra.mxu0 %v1758
      %1782 = vmatprep.subr.bf16.mxu0 0
      %1783 = vmatpush1.bf16.msra.mxu0 %v1757
      %1784 = vmatprep.subr.bf16.mxu0 0
      %1785 = vmatpush2.bf16.msra.mxu0 0
      %1786 = vmatprep.subr.bf16.mxu0 0
      %1787 = vmatpush2.bf16.msra.mxu0 0
      %1788 = vmatprep.subr.bf16.mxu0 0
      %1789 = vmatpush2.bf16.msra.mxu0 0
      %1790 = vmatprep.subr.bf16.mxu0 0
      %1791 = vmatpush2.bf16.msra.mxu0 0
      %1792 = vmatprep.subr.bf16.mxu0 0
      %1793 = vmatpush2.bf16.msra.mxu0 0
      %1794 = vmatprep.subr.bf16.mxu0 0
      %1795 = vmatpush2.bf16.msra.mxu0 0
      %1796 = vmatprep.subr.bf16.mxu0 0
      %1797 = vmatpush2.bf16.msra.mxu0 0
      %1798 = vmatprep.subr.bf16.mxu0 0
      %1799 = vmatpush2.bf16.msra.mxu0 0
      %1800 = vmatprep.mubr.bf16.mxu0 0
      %1801 = vmatmul.mubr.bf16.gmra.mxu0 %v1766
      %v1802 = vpop.f32.mrf.mxu0
      %v1803 = vadd.f32 0.0, %v1802
      %v1804 = vpop.f32.mrf.mxu0
      %v1805 = vpop.f32.mrf.mxu0
      %v1806 = vpop.f32.mrf.mxu0
      %1807 = vdwg.mxu0
      %v1808 = vlaneseq
      %v1809 = vshrl.u32 %v1808, 7
      %v1810 = vsub.s32 0, %v1809
      %v1811 = vrot.slane %v1803, %v1810
      %v1812 = vlaneseq
      %v1813 = vshrl.u32 %v1812, 7
      %v1814 = vsub.s32 1, %v1813
      %v1815 = vrot.slane %v1803, %v1814
      %v1816 = vadd.f32 %v1716, %v1811
      %v1817 = vadd.f32 %v1717, %v1811
      %v1818 = vadd.f32 %v1718, %v1811
      %v1819 = vadd.f32 %v1719, %v1811
      %v1820 = vadd.f32 %v1720, %v1811
      %v1821 = vadd.f32 %v1721, %v1811
      %v1822 = vadd.f32 %v1722, %v1811
      %v1823 = vadd.f32 %v1723, %v1811
      %v1824 = vadd.f32 %v1724, %v1815
      %v1825 = vadd.f32 %v1725, %v1815
      %v1826 = vadd.f32 %v1726, %v1815
      %v1827 = vadd.f32 %v1727, %v1815
      %v1828 = vadd.f32 %v1728, %v1815
      %v1829 = vadd.f32 %v1729, %v1815
      %v1830 = vadd.f32 %v1730, %v1815
      %v1831 = vadd.f32 %v1731, %v1815
      %v1832 = vadd.f32 %v1816, %v329
      %v1833 = vadd.f32 %v1817, %v330
      %v1834 = vadd.f32 %v1818, %v331
      %v1835 = vadd.f32 %v1819, %v332
      %v1836 = vadd.f32 %v1820, %v333
      %v1837 = vadd.f32 %v1821, %v334
      %v1838 = vadd.f32 %v1822, %v335
      %v1839 = vadd.f32 %v1823, %v336
      %v1840 = vadd.f32 %v1824, %v337
      %v1841 = vadd.f32 %v1825, %v338
      %v1842 = vadd.f32 %v1826, %v339
      %v1843 = vadd.f32 %v1827, %v340
      %v1844 = vadd.f32 %v1828, %v341
      %v1845 = vadd.f32 %v1829, %v342
      %v1846 = vadd.f32 %v1830, %v343
      %v1847 = vadd.f32 %v1831, %v344
      %1848 = vst.msk [vmem:[%s6] sm:$0xff] %vm411, %v1832
      %1849 = vst.msk [vmem:[%s6 + $0x8] sm:$0xff] %vm411, %v1833
      %1850 = vst.msk [vmem:[%s6 + $0x10] sm:$0xff] %vm411, %v1834
      %1851 = vst.msk [vmem:[%s6 + $0x18] sm:$0xff] %vm411, %v1835
      %1852 = vst.msk [vmem:[%s6 + $0x20] sm:$0xff] %vm411, %v1836
      %1853 = vst.msk [vmem:[%s6 + $0x28] sm:$0xff] %vm411, %v1837
      %1854 = vst.msk [vmem:[%s6 + $0x30] sm:$0xff] %vm411, %v1838
      %1855 = vst.msk [vmem:[%s6 + $0x38] sm:$0xff] %vm411, %v1839
      %1856 = vst.msk [vmem:[%s6 + $0x40] sm:$0xff] %vm411, %v1840
      %1857 = vst.msk [vmem:[%s6 + $0x48] sm:$0xff] %vm411, %v1841
      %1858 = vst.msk [vmem:[%s6 + $0x50] sm:$0xff] %vm411, %v1842
      %1859 = vst.msk [vmem:[%s6 + $0x58] sm:$0xff] %vm411, %v1843
      %1860 = vst.msk [vmem:[%s6 + $0x60] sm:$0xff] %vm411, %v1844
      %1861 = vst.msk [vmem:[%s6 + $0x68] sm:$0xff] %vm411, %v1845
      %1862 = vst.msk [vmem:[%s6 + $0x70] sm:$0xff] %vm411, %v1846
      %1863 = vst.msk [vmem:[%s6 + $0x78] sm:$0xff] %vm411, %v1847
      // Predicated region
      $region49: #{score_net_forward.4} parent=43 // pred_check
        %p1864 = pneg %p176
      $region50: #{score_net_forward.4} parent=43 // pred_check_branch
        %1866 = sbr.rel (%p1864) target = $region52
      $region51: #{score_net_forward.4} parent=43 // pred_region
        _
      $region52: #{score_net_forward.4} parent=43 // pred_fallthru
        _
      // Predicated region
      $region53: #{score_net_forward.4} parent=43 // pred_check
        %p1867 = pneg %p176
      $region54: #{score_net_forward.4} parent=43 // pred_check_branch
        %1869 = sbr.rel (%p1867) target = $region56
      $region55: #{score_net_forward.4} parent=43 // pred_region
        _
      $region56: #{score_net_forward.4} parent=43 // pred_fallthru
        _
    $region44: #{score_net_forward.4} parent=5 // pred_fallthru
      _
    %p1870 = scmp.le.s32.totalorder 2, %s12
    // Predicated region
    $region57: #{score_net_forward.4} parent=5 // pred_check
      %p1871 = pneg %p1870
    $region58: #{score_net_forward.4} parent=5 // pred_check_branch
      %1873 = sbr.rel (%p1871) target = $region60
    $region59: #{score_net_forward.4} parent=5 // pred_region
      %s1874 = ssub.s32 %s12, 2
    $region60: #{score_net_forward.4} parent=5 // pred_fallthru
      _
  $region6: #{score_net_forward.4} parent=0 // loop_footer
    %s16 = sadd.s32 1, %s12
  $region7: #{score_net_forward.4} parent=0 // loop_footer_branch
    %11 = sbr.rel target = $region3
  $region8: #{score_net_forward.4} parent=0 // loop_exit
    _

</llo_original>
